<compile_context>
chip_gen: v7x
topology: tpu7x:2x2x1
jax: 0.10.0
libtpu: 0.0.40
codegen_flags: <defaults>
</compile_context>

<pallas_src>
import functools

import numpy as np
import jax
import jax.numpy as jnp
from jax.experimental import pallas as pl
from jax.experimental.pallas import tpu as pltpu


def _roi_pool_kernel(x2d_ref, bbt_ref, valid_ref, scale_ref, out_ref, *, h, w):
    f32 = jnp.float32
    HW = x2d_ref.shape[1]
    TN = bbt_ref.shape[1]

    inv_scale = 1.0 / scale_ref[0]           # one scalar reciprocal, hoisted

    # ---- box preprocessing (mirrors the PyTorch module, applied to all boxes) ----
    x1 = bbt_ref[0:1, :] * inv_scale          # (1, TN)
    y1 = bbt_ref[1:2, :] * inv_scale
    x2 = bbt_ref[2:3, :] * inv_scale
    y2 = bbt_ref[3:4, :] * inv_scale

    x_eq = x1 == x2
    y_eq = y1 == y2
    x1 = jnp.where(x_eq, x1 - 1.0, x1)
    x2 = jnp.where(x_eq, x2 + 1.0, x2)
    y1 = jnp.where(y_eq, y1 - 1.0, y1)
    y2 = jnp.where(y_eq, y2 + 1.0, y2)

    x1 = jnp.maximum(x1, 0.0)
    y1 = jnp.maximum(y1, 0.0)
    x2 = jnp.maximum(x2, 0.0)
    y2 = jnp.maximum(y2, 0.0)
    x2 = jnp.where(x2 >= w, f32(w - 1), x2)
    y2 = jnp.where(y2 >= h, f32(h - 1), y2)

    # ---- roi_align: output_size=1, spatial_scale=1, sampling_ratio=2, aligned=False ----
    roi_w = jnp.maximum(x2 - x1, 1.0)
    roi_h = jnp.maximum(y2 - y1, 1.0)

    # valid-box mask and the 1/4 sample average folded into the per-corner weights.
    qv = 0.25 * valid_ref[...]                # (1, TN)

    row = jax.lax.broadcasted_iota(jnp.int32, (HW, 1), 0)   # (HW, 1) iota only
    W = jnp.zeros((HW, TN), f32)

    for iy in range(2):                       # 2x2 sampling grid, averaged (count = 4)
        yy = y1 + (iy + 0.5) * roi_h * 0.5
        for ix in range(2):
            xx = x1 + (ix + 0.5) * roi_w * 0.5
            oob = (yy < -1.0) | (yy > h) | (xx < -1.0) | (xx > w)
            yc = jnp.maximum(yy, 0.0)
            xc = jnp.maximum(xx, 0.0)
            y_lo = yc.astype(jnp.int32)
            x_lo = xc.astype(jnp.int32)
            y_top = y_lo >= h - 1
            x_top = x_lo >= w - 1
            y_hi = jnp.where(y_top, h - 1, y_lo + 1)
            x_hi = jnp.where(x_top, w - 1, x_lo + 1)
            y_lo = jnp.where(y_top, h - 1, y_lo)
            x_lo = jnp.where(x_top, w - 1, x_lo)
            yc = jnp.where(y_top, f32(h - 1), yc)
            xc = jnp.where(x_top, f32(w - 1), xc)
            ly = yc - y_lo.astype(f32)
            lx = xc - x_lo.astype(f32)
            hy = 1.0 - ly
            hx = 1.0 - lx
            mq = jnp.where(oob, 0.0, qv)      # (1, TN): 0.25 * valid * in-bounds
            for yi, xi, wt in ((y_lo, x_lo, hy * hx), (y_lo, x_hi, hy * lx),
                               (y_hi, x_lo, ly * hx), (y_hi, x_hi, ly * lx)):
                idx = yi * w + xi                           # (1, TN) int32
                W = W + jnp.where(row == idx, wt * mq, 0.0)  # fused one-hot scatter

    # Single-pass bf16 MXU matmul, f32 accumulation.
    out_ref[...] = jnp.dot(x2d_ref[...].astype(jnp.bfloat16),
                           W.astype(jnp.bfloat16),
                           preferred_element_type=f32)


def _choose_tile_n(N, HW):
    """Box-axis tile: multiple of 128, ~8 MiB f32 W-tile budget (v7x-safe)."""
    if N <= 128:
        return int(N)                         # single block equal to the full dim
    budget = 8 * 1024 * 1024                  # bytes for the f32 (HW, TN) W tile
    tn = (budget // (HW * 4)) // 128 * 128
    tn = max(128, min(2048, tn))
    tn = min(tn, ((N + 127) // 128) * 128)    # don't over-pad small N
    return int(tn)


class ProjectROIPool:
    """JAX/Pallas version of the PyTorch ProjectROIPool module (no learnable params)."""

    def __init__(self, dataset, scene_size, project_scale, tile_n=None):
        self.dataset = dataset
        self.scene_size = scene_size
        self.project_scale = project_scale
        self.tile_n = tile_n

    def __call__(self, x2d, bb, valid_bb, scale):
        d, h, w = x2d.shape
        S0, S1, S2 = self.scene_size
        N = S0 * S2 * S1
        HW = h * w
        assert bb.shape == (N, 4)

        x2d_flat = jnp.asarray(x2d, jnp.float32).reshape(d, HW)
        bbt = jnp.asarray(bb, jnp.float32).T                   # (4, N): x1,y1,x2,y2 rows
        valid_f = jnp.asarray(valid_bb, jnp.float32).reshape(1, N)
        scale_arr = jnp.asarray([scale], jnp.float32)

        tn = self.tile_n if self.tile_n is not None else _choose_tile_n(N, HW)
        n_pad = ((N + tn - 1) // tn) * tn
        if n_pad != N:                                          # padded boxes are masked
            bbt = jnp.pad(bbt, ((0, 0), (0, n_pad - N)))
            valid_f = jnp.pad(valid_f, ((0, 0), (0, n_pad - N)))
        grid = (n_pad // tn,)

        # VMEM estimate: resident x2d (f32 + bf16), W tile (f32 + bf16), streamed bufs.
        est_vmem = (2 * d * HW * 4 + d * HW * 2
                    + HW * tn * 6
                    + 2 * (4 + 1 + d) * tn * 4
                    + (4 << 20))
        vmem_limit = int(min(max(2 * est_vmem, 32 << 20), 48 << 20))

        kernel = functools.partial(_roi_pool_kernel, h=h, w=w)
        x3d = pl.pallas_call(
            kernel,
            out_shape=jax.ShapeDtypeStruct((d, n_pad), jnp.float32),
            grid=grid,
            in_specs=[
                pl.BlockSpec((d, HW), lambda i: (0, 0)),        # x2d, resident in VMEM
                pl.BlockSpec((4, tn), lambda i: (0, i)),        # box tile
                pl.BlockSpec((1, tn), lambda i: (0, i)),        # valid-mask tile
                pl.BlockSpec(memory_space=pltpu.MemorySpace.SMEM),  # scale scalar
            ],
            out_specs=pl.BlockSpec((d, tn), lambda i: (0, i)),
            compiler_params=pltpu.CompilerParams(
                dimension_semantics=("parallel",),
                vmem_limit_bytes=vmem_limit,
            ),
            cost_estimate=pl.CostEstimate(
                flops=int(2 * d * HW * n_pad),
                transcendentals=0,
                bytes_accessed=int((d * HW + 4 * n_pad + n_pad + 1 + d * n_pad) * 4),
            ),
        )(x2d_flat, bbt, valid_f, scale_arr)

        x3d = x3d[:, :N]
        if self.dataset == 'NYU':
            x3d = x3d.reshape(d, S0, S2, S1)
            x3d = jnp.transpose(x3d, (0, 1, 3, 2))              # (d, S0, S1, S2)
        # TODO(synk): the 'kitti' branch of the reference uses undefined variables
        # (x3ds, bs, c) and cannot be translated faithfully; only NYU is implemented.
        return x3d


def _reference(x2d, bb, valid, scale, scene_size):
    """Pure NumPy float32 reference (direct bilinear gather), for verification."""
    x2d = np.asarray(x2d, np.float32)
    d, h, w = x2d.shape
    inv_scale = np.float32(1.0) / np.float32(scale)
    bb = np.asarray(bb, np.float32) * inv_scale
    x1, y1, x2, y2 = (bb[:, i].copy() for i in range(4))
    xe, ye = x1 == x2, y1 == y2
    x1 = np.where(xe, x1 - 1, x1).astype(np.float32)
    x2 = np.where(xe, x2 + 1, x2).astype(np.float32)
    y1 = np.where(ye, y1 - 1, y1).astype(np.float32)
    y2 = np.where(ye, y2 + 1, y2).astype(np.float32)
    x1 = np.maximum(x1, 0).astype(np.float32); y1 = np.maximum(y1, 0).astype(np.float32)
    x2 = np.maximum(x2, 0).astype(np.float32); y2 = np.maximum(y2, 0).astype(np.float32)
    x2 = np.where(x2 >= w, w - 1, x2).astype(np.float32)
    y2 = np.where(y2 >= h, h - 1, y2).astype(np.float32)
    rw = np.maximum(x2 - x1, 1.0).astype(np.float32)
    rh = np.maximum(y2 - y1, 1.0).astype(np.float32)
    N = bb.shape[0]
    x2f = x2d.reshape(d, h * w)
    acc = np.zeros((d, N), np.float32)
    for iy in range(2):
        yy = (y1 + np.float32(iy + 0.5) * rh * np.float32(0.5)).astype(np.float32)
        for ix in range(2):
            xx = (x1 + np.float32(ix + 0.5) * rw * np.float32(0.5)).astype(np.float32)
            oob = (yy < -1.0) | (yy > h) | (xx < -1.0) | (xx > w)
            yc = np.maximum(yy, 0).astype(np.float32)
            xc = np.maximum(xx, 0).astype(np.float32)
            yl = yc.astype(np.int32); xl = xc.astype(np.int32)
            yt = yl >= h - 1; xt = xl >= w - 1
            yh_ = np.where(yt, h - 1, yl + 1); xh_ = np.where(xt, w - 1, xl + 1)
            yl = np.where(yt, h - 1, yl); xl = np.where(xt, w - 1, xl)
            yc = np.where(yt, h - 1, yc).astype(np.float32)
            xc = np.where(xt, w - 1, xc).astype(np.float32)
            ly = (yc - yl).astype(np.float32); lx = (xc - xl).astype(np.float32)
            hy = (1 - ly).astype(np.float32); hx = (1 - lx).astype(np.float32)
            for yi, xi, wt in ((yl, xl, hy * hx), (yl, xh_, hy * lx),
                               (yh_, xl, ly * hx), (yh_, xh_, ly * lx)):
                wt = (np.where(oob, 0, wt) * np.float32(0.25)).astype(np.float32)
                acc += wt[None, :] * x2f[:, yi * w + xi]
    x3d = acc * np.asarray(valid, np.float32)[None, :]
    S0, S1, S2 = scene_size
    return np.transpose(x3d.reshape(d, S0, S2, S1), (0, 1, 3, 2))


if __name__ == "__main__":
    dataset = "NYU"
    scene_size = (4, 6, 6)              # N = 4*6*6 = 144 -> 2 box tiles of 128 (padded)
    project_scale = 1
    d, h, w = 8, 16, 16
    scale = 2.0
    N = scene_size[0] * scene_size[2] * scene_size[1]

    key = jax.random.PRNGKey(0)
    k1, k2, k3, k4 = jax.random.split(key, 4)
    x2d = jax.random.normal(k1, (d, h, w), jnp.float32)
    mins = jax.random.uniform(k2, (N, 2), jnp.float32, 0.0, (w - 2) * scale)
    sizes = jax.random.uniform(k3, (N, 2), jnp.float32, 0.0, 6.0)
    bb = jnp.concatenate([mins, mins + sizes], axis=1)       # (x1, y1, x2, y2)
    # a couple of degenerate boxes to exercise the x1==x2 / y1==y2 adjustment path
    bb = bb.at[0].set(jnp.array([8.0, 8.0, 8.0, 8.0], jnp.float32))
    bb = bb.at[1].set(jnp.array([0.0, 4.0, 0.0, 9.0], jnp.float32))
    valid_bb = jax.random.uniform(k4, (N,)) > 0.3

    # tile_n=128 forces a 2-step grid (with padding) even at this toy size.
    pool = ProjectROIPool(dataset, scene_size, project_scale, tile_n=128)
    x3d = pool(x2d, bb, valid_bb, scale)
    x3d = jax.block_until_ready(x3d)

    ref = _reference(x2d, bb, valid_bb, scale, scene_size)
    # bf16 single-pass MXU matmul -> relaxed tolerance vs. the f32 reference.
    np.testing.assert_allclose(np.asarray(x3d), ref, rtol=5e-2, atol=5e-2)
    print("KERNEL_OK")
</pallas_src>

<mosaic_0001>
module attributes {stable_mosaic.version = 11 : i64} {
  func.func @_roi_pool_kernel(%arg0: i32, %arg1: memref<8x256xf32, #tpu.memory_space<vmem>>, %arg2: memref<4x128xf32, #tpu.memory_space<vmem>>, %arg3: memref<1x128xf32, #tpu.memory_space<vmem>>, %arg4: memref<1xf32, #tpu.memory_space<smem>>, %arg5: memref<8x128xf32, #tpu.memory_space<vmem>>) attributes {dimension_semantics = [#tpu.dimension_semantics<parallel>], iteration_bounds = array<i64: 2>, scalar_prefetch = 0 : i64, scratch_operands = 0 : i64, tpu.core_type = #tpu.core_type<tc>, window_params = [{pipeline_mode = #tpu.pipeline_mode<synchronous>, transform_indices = @transform_0, window_bounds = array<i64: 8, 256>}, {transform_indices = @transform_1, window_bounds = array<i64: 4, 128>}, {transform_indices = @transform_2, window_bounds = array<i64: 1, 128>}, {transform_indices = @transform_3, window_bounds = array<i64: 1>}, {transform_indices = @transform_4, window_bounds = array<i64: 8, 128>}]} {
    %c0 = arith.constant 0 : index
    %0 = memref.load %arg4[%c0] : memref<1xf32, #tpu.memory_space<smem>>
    %cst = arith.constant 1.000000e+00 : f32
    %1 = arith.divf %cst, %0 : f32
    %c0_0 = arith.constant 0 : index
    %c0_1 = arith.constant 0 : index
    %2 = vector.load %arg2[%c0_0, %c0_1] : memref<4x128xf32, #tpu.memory_space<vmem>>, vector<1x128xf32>
    %3 = vector.broadcast %1 : f32 to vector<1x128xf32>
    %4 = arith.mulf %2, %3 : vector<1x128xf32>
    %c1 = arith.constant 1 : index
    %c0_2 = arith.constant 0 : index
    %5 = vector.load %arg2[%c1, %c0_2] : memref<4x128xf32, #tpu.memory_space<vmem>>, vector<1x128xf32>
    %6 = vector.broadcast %1 : f32 to vector<1x128xf32>
    %7 = arith.mulf %5, %6 : vector<1x128xf32>
    %c2 = arith.constant 2 : index
    %c0_3 = arith.constant 0 : index
    %8 = vector.load %arg2[%c2, %c0_3] : memref<4x128xf32, #tpu.memory_space<vmem>>, vector<1x128xf32>
    %9 = vector.broadcast %1 : f32 to vector<1x128xf32>
    %10 = arith.mulf %8, %9 : vector<1x128xf32>
    %c3 = arith.constant 3 : index
    %c0_4 = arith.constant 0 : index
    %11 = vector.load %arg2[%c3, %c0_4] : memref<4x128xf32, #tpu.memory_space<vmem>>, vector<1x128xf32>
    %12 = vector.broadcast %1 : f32 to vector<1x128xf32>
    %13 = arith.mulf %11, %12 : vector<1x128xf32>
    %14 = arith.cmpf oeq, %4, %10 : vector<1x128xf32>
    %15 = arith.cmpf oeq, %7, %13 : vector<1x128xf32>
    %cst_5 = arith.constant 1.000000e+00 : f32
    %16 = vector.broadcast %cst_5 : f32 to vector<1x128xf32>
    %17 = arith.subf %4, %16 : vector<1x128xf32>
    %18 = arith.select %14, %17, %4 : vector<1x128xi1>, vector<1x128xf32>
    %cst_6 = arith.constant 1.000000e+00 : f32
    %19 = vector.broadcast %cst_6 : f32 to vector<1x128xf32>
    %20 = arith.addf %10, %19 : vector<1x128xf32>
    %21 = arith.select %14, %20, %10 : vector<1x128xi1>, vector<1x128xf32>
    %cst_7 = arith.constant 1.000000e+00 : f32
    %22 = vector.broadcast %cst_7 : f32 to vector<1x128xf32>
    %23 = arith.subf %7, %22 : vector<1x128xf32>
    %24 = arith.select %15, %23, %7 : vector<1x128xi1>, vector<1x128xf32>
    %cst_8 = arith.constant 1.000000e+00 : f32
    %25 = vector.broadcast %cst_8 : f32 to vector<1x128xf32>
    %26 = arith.addf %13, %25 : vector<1x128xf32>
    %27 = arith.select %15, %26, %13 : vector<1x128xi1>, vector<1x128xf32>
    %cst_9 = arith.constant 0.000000e+00 : f32
    %28 = vector.broadcast %cst_9 : f32 to vector<1x128xf32>
    %29 = arith.maximumf %18, %28 : vector<1x128xf32>
    %cst_10 = arith.constant 0.000000e+00 : f32
    %30 = vector.broadcast %cst_10 : f32 to vector<1x128xf32>
    %31 = arith.maximumf %24, %30 : vector<1x128xf32>
    %cst_11 = arith.constant 0.000000e+00 : f32
    %32 = vector.broadcast %cst_11 : f32 to vector<1x128xf32>
    %33 = arith.maximumf %21, %32 : vector<1x128xf32>
    %cst_12 = arith.constant 0.000000e+00 : f32
    %34 = vector.broadcast %cst_12 : f32 to vector<1x128xf32>
    %35 = arith.maximumf %27, %34 : vector<1x128xf32>
    %cst_13 = arith.constant 1.600000e+01 : f32
    %36 = vector.broadcast %cst_13 : f32 to vector<1x128xf32>
    %37 = arith.cmpf oge, %33, %36 : vector<1x128xf32>
    %cst_14 = arith.constant 1.500000e+01 : f32
    %38 = vector.broadcast %cst_14 : f32 to vector<1x128xf32>
    %39 = arith.select %37, %38, %33 : vector<1x128xi1>, vector<1x128xf32>
    %cst_15 = arith.constant 1.600000e+01 : f32
    %40 = vector.broadcast %cst_15 : f32 to vector<1x128xf32>
    %41 = arith.cmpf oge, %35, %40 : vector<1x128xf32>
    %cst_16 = arith.constant 1.500000e+01 : f32
    %42 = vector.broadcast %cst_16 : f32 to vector<1x128xf32>
    %43 = arith.select %41, %42, %35 : vector<1x128xi1>, vector<1x128xf32>
    %44 = arith.subf %39, %29 : vector<1x128xf32>
    %cst_17 = arith.constant 1.000000e+00 : f32
    %45 = vector.broadcast %cst_17 : f32 to vector<1x128xf32>
    %46 = arith.maximumf %44, %45 : vector<1x128xf32>
    %47 = arith.subf %43, %31 : vector<1x128xf32>
    %cst_18 = arith.constant 1.000000e+00 : f32
    %48 = vector.broadcast %cst_18 : f32 to vector<1x128xf32>
    %49 = arith.maximumf %47, %48 : vector<1x128xf32>
    %c0_19 = arith.constant 0 : index
    %c0_20 = arith.constant 0 : index
    %50 = vector.load %arg3[%c0_19, %c0_20] : memref<1x128xf32, #tpu.memory_space<vmem>>, vector<1x128xf32>
    %cst_21 = arith.constant 2.500000e-01 : f32
    %51 = vector.broadcast %cst_21 : f32 to vector<1x128xf32>
    %52 = arith.mulf %51, %50 : vector<1x128xf32>
    %53 = tpu.iota {dimensions = array<i32: 0>} : vector<256x1xi32>
    %cst_22 = arith.constant 0.000000e+00 : f32
    %54 = vector.broadcast %cst_22 : f32 to vector<256x128xf32>
    %cst_23 = arith.constant 5.000000e-01 : f32
    %55 = vector.broadcast %cst_23 : f32 to vector<1x128xf32>
    %56 = arith.mulf %55, %49 : vector<1x128xf32>
    %cst_24 = arith.constant 5.000000e-01 : f32
    %57 = vector.broadcast %cst_24 : f32 to vector<1x128xf32>
    %58 = arith.mulf %56, %57 : vector<1x128xf32>
    %59 = arith.addf %31, %58 : vector<1x128xf32>
    %cst_25 = arith.constant 5.000000e-01 : f32
    %60 = vector.broadcast %cst_25 : f32 to vector<1x128xf32>
    %61 = arith.mulf %60, %46 : vector<1x128xf32>
    %cst_26 = arith.constant 5.000000e-01 : f32
    %62 = vector.broadcast %cst_26 : f32 to vector<1x128xf32>
    %63 = arith.mulf %61, %62 : vector<1x128xf32>
    %64 = arith.addf %29, %63 : vector<1x128xf32>
    %cst_27 = arith.constant -1.000000e+00 : f32
    %65 = vector.broadcast %cst_27 : f32 to vector<1x128xf32>
    %66 = arith.cmpf olt, %59, %65 : vector<1x128xf32>
    %cst_28 = arith.constant 1.600000e+01 : f32
    %67 = vector.broadcast %cst_28 : f32 to vector<1x128xf32>
    %68 = arith.cmpf ogt, %59, %67 : vector<1x128xf32>
    %69 = arith.ori %66, %68 : vector<1x128xi1>
    %cst_29 = arith.constant -1.000000e+00 : f32
    %70 = vector.broadcast %cst_29 : f32 to vector<1x128xf32>
    %71 = arith.cmpf olt, %64, %70 : vector<1x128xf32>
    %72 = arith.ori %69, %71 : vector<1x128xi1>
    %cst_30 = arith.constant 1.600000e+01 : f32
    %73 = vector.broadcast %cst_30 : f32 to vector<1x128xf32>
    %74 = arith.cmpf ogt, %64, %73 : vector<1x128xf32>
    %75 = arith.ori %72, %74 : vector<1x128xi1>
    %cst_31 = arith.constant 0.000000e+00 : f32
    %76 = vector.broadcast %cst_31 : f32 to vector<1x128xf32>
    %77 = arith.maximumf %59, %76 : vector<1x128xf32>
    %cst_32 = arith.constant 0.000000e+00 : f32
    %78 = vector.broadcast %cst_32 : f32 to vector<1x128xf32>
    %79 = arith.maximumf %64, %78 : vector<1x128xf32>
    %80 = arith.fptosi %77 : vector<1x128xf32> to vector<1x128xi32>
    %81 = arith.fptosi %79 : vector<1x128xf32> to vector<1x128xi32>
    %c15_i32 = arith.constant 15 : i32
    %82 = vector.broadcast %c15_i32 : i32 to vector<1x128xi32>
    %83 = arith.cmpi sge, %80, %82 : vector<1x128xi32>
    %c15_i32_33 = arith.constant 15 : i32
    %84 = vector.broadcast %c15_i32_33 : i32 to vector<1x128xi32>
    %85 = arith.cmpi sge, %81, %84 : vector<1x128xi32>
    %c1_i32 = arith.constant 1 : i32
    %86 = vector.broadcast %c1_i32 : i32 to vector<1x128xi32>
    %87 = arith.addi %80, %86 : vector<1x128xi32>
    %c15_i32_34 = arith.constant 15 : i32
    %88 = vector.broadcast %c15_i32_34 : i32 to vector<1x128xi32>
    %89 = arith.select %83, %88, %87 : vector<1x128xi1>, vector<1x128xi32>
    %c1_i32_35 = arith.constant 1 : i32
    %90 = vector.broadcast %c1_i32_35 : i32 to vector<1x128xi32>
    %91 = arith.addi %81, %90 : vector<1x128xi32>
    %c15_i32_36 = arith.constant 15 : i32
    %92 = vector.broadcast %c15_i32_36 : i32 to vector<1x128xi32>
    %93 = arith.select %85, %92, %91 : vector<1x128xi1>, vector<1x128xi32>
    %c15_i32_37 = arith.constant 15 : i32
    %94 = vector.broadcast %c15_i32_37 : i32 to vector<1x128xi32>
    %95 = arith.select %83, %94, %80 : vector<1x128xi1>, vector<1x128xi32>
    %c15_i32_38 = arith.constant 15 : i32
    %96 = vector.broadcast %c15_i32_38 : i32 to vector<1x128xi32>
    %97 = arith.select %85, %96, %81 : vector<1x128xi1>, vector<1x128xi32>
    %cst_39 = arith.constant 1.500000e+01 : f32
    %98 = vector.broadcast %cst_39 : f32 to vector<1x128xf32>
    %99 = arith.select %83, %98, %77 : vector<1x128xi1>, vector<1x128xf32>
    %cst_40 = arith.constant 1.500000e+01 : f32
    %100 = vector.broadcast %cst_40 : f32 to vector<1x128xf32>
    %101 = arith.select %85, %100, %79 : vector<1x128xi1>, vector<1x128xf32>
    %102 = arith.sitofp %95 : vector<1x128xi32> to vector<1x128xf32>
    %103 = arith.subf %99, %102 : vector<1x128xf32>
    %104 = arith.sitofp %97 : vector<1x128xi32> to vector<1x128xf32>
    %105 = arith.subf %101, %104 : vector<1x128xf32>
    %cst_41 = arith.constant 1.000000e+00 : f32
    %106 = vector.broadcast %cst_41 : f32 to vector<1x128xf32>
    %107 = arith.subf %106, %103 : vector<1x128xf32>
    %cst_42 = arith.constant 1.000000e+00 : f32
    %108 = vector.broadcast %cst_42 : f32 to vector<1x128xf32>
    %109 = arith.subf %108, %105 : vector<1x128xf32>
    %cst_43 = arith.constant 0.000000e+00 : f32
    %110 = vector.broadcast %cst_43 : f32 to vector<1x128xf32>
    %111 = arith.select %75, %110, %52 : vector<1x128xi1>, vector<1x128xf32>
    %112 = arith.mulf %107, %109 : vector<1x128xf32>
    %113 = arith.mulf %107, %105 : vector<1x128xf32>
    %114 = arith.mulf %103, %109 : vector<1x128xf32>
    %115 = arith.mulf %103, %105 : vector<1x128xf32>
    %c16_i32 = arith.constant 16 : i32
    %116 = vector.broadcast %c16_i32 : i32 to vector<1x128xi32>
    %117 = arith.muli %95, %116 : vector<1x128xi32>
    %118 = arith.addi %117, %97 : vector<1x128xi32>
    %119 = vector.broadcast %53 : vector<256x1xi32> to vector<256x128xi32>
    %120 = vector.broadcast %118 : vector<1x128xi32> to vector<256x128xi32>
    %121 = arith.cmpi eq, %119, %120 : vector<256x128xi32>
    %122 = arith.mulf %112, %111 : vector<1x128xf32>
    %cst_44 = arith.constant 0.000000e+00 : f32
    %123 = vector.shape_cast %122 : vector<1x128xf32> to vector<1x128xf32>
    %124 = vector.broadcast %123 : vector<1x128xf32> to vector<256x128xf32>
    %125 = vector.broadcast %cst_44 : f32 to vector<256x128xf32>
    %126 = arith.select %121, %124, %125 : vector<256x128xi1>, vector<256x128xf32>
    %127 = arith.addf %54, %126 : vector<256x128xf32>
    %c16_i32_45 = arith.constant 16 : i32
    %128 = vector.broadcast %c16_i32_45 : i32 to vector<1x128xi32>
    %129 = arith.muli %95, %128 : vector<1x128xi32>
    %130 = arith.addi %129, %93 : vector<1x128xi32>
    %131 = vector.broadcast %53 : vector<256x1xi32> to vector<256x128xi32>
    %132 = vector.broadcast %130 : vector<1x128xi32> to vector<256x128xi32>
    %133 = arith.cmpi eq, %131, %132 : vector<256x128xi32>
    %134 = arith.mulf %113, %111 : vector<1x128xf32>
    %cst_46 = arith.constant 0.000000e+00 : f32
    %135 = vector.shape_cast %134 : vector<1x128xf32> to vector<1x128xf32>
    %136 = vector.broadcast %135 : vector<1x128xf32> to vector<256x128xf32>
    %137 = vector.broadcast %cst_46 : f32 to vector<256x128xf32>
    %138 = arith.select %133, %136, %137 : vector<256x128xi1>, vector<256x128xf32>
    %139 = arith.addf %127, %138 : vector<256x128xf32>
    %c16_i32_47 = arith.constant 16 : i32
    %140 = vector.broadcast %c16_i32_47 : i32 to vector<1x128xi32>
    %141 = arith.muli %89, %140 : vector<1x128xi32>
    %142 = arith.addi %141, %97 : vector<1x128xi32>
    %143 = vector.broadcast %53 : vector<256x1xi32> to vector<256x128xi32>
    %144 = vector.broadcast %142 : vector<1x128xi32> to vector<256x128xi32>
    %145 = arith.cmpi eq, %143, %144 : vector<256x128xi32>
    %146 = arith.mulf %114, %111 : vector<1x128xf32>
    %cst_48 = arith.constant 0.000000e+00 : f32
    %147 = vector.shape_cast %146 : vector<1x128xf32> to vector<1x128xf32>
    %148 = vector.broadcast %147 : vector<1x128xf32> to vector<256x128xf32>
    %149 = vector.broadcast %cst_48 : f32 to vector<256x128xf32>
    %150 = arith.select %145, %148, %149 : vector<256x128xi1>, vector<256x128xf32>
    %151 = arith.addf %139, %150 : vector<256x128xf32>
    %c16_i32_49 = arith.constant 16 : i32
    %152 = vector.broadcast %c16_i32_49 : i32 to vector<1x128xi32>
    %153 = arith.muli %89, %152 : vector<1x128xi32>
    %154 = arith.addi %153, %93 : vector<1x128xi32>
    %155 = vector.broadcast %53 : vector<256x1xi32> to vector<256x128xi32>
    %156 = vector.broadcast %154 : vector<1x128xi32> to vector<256x128xi32>
    %157 = arith.cmpi eq, %155, %156 : vector<256x128xi32>
    %158 = arith.mulf %115, %111 : vector<1x128xf32>
    %cst_50 = arith.constant 0.000000e+00 : f32
    %159 = vector.shape_cast %158 : vector<1x128xf32> to vector<1x128xf32>
    %160 = vector.broadcast %159 : vector<1x128xf32> to vector<256x128xf32>
    %161 = vector.broadcast %cst_50 : f32 to vector<256x128xf32>
    %162 = arith.select %157, %160, %161 : vector<256x128xi1>, vector<256x128xf32>
    %163 = arith.addf %151, %162 : vector<256x128xf32>
    %cst_51 = arith.constant 1.500000e+00 : f32
    %164 = vector.broadcast %cst_51 : f32 to vector<1x128xf32>
    %165 = arith.mulf %164, %46 : vector<1x128xf32>
    %cst_52 = arith.constant 5.000000e-01 : f32
    %166 = vector.broadcast %cst_52 : f32 to vector<1x128xf32>
    %167 = arith.mulf %165, %166 : vector<1x128xf32>
    %168 = arith.addf %29, %167 : vector<1x128xf32>
    %cst_53 = arith.constant -1.000000e+00 : f32
    %169 = vector.broadcast %cst_53 : f32 to vector<1x128xf32>
    %170 = arith.cmpf olt, %59, %169 : vector<1x128xf32>
    %cst_54 = arith.constant 1.600000e+01 : f32
    %171 = vector.broadcast %cst_54 : f32 to vector<1x128xf32>
    %172 = arith.cmpf ogt, %59, %171 : vector<1x128xf32>
    %173 = arith.ori %170, %172 : vector<1x128xi1>
    %cst_55 = arith.constant -1.000000e+00 : f32
    %174 = vector.broadcast %cst_55 : f32 to vector<1x128xf32>
    %175 = arith.cmpf olt, %168, %174 : vector<1x128xf32>
    %176 = arith.ori %173, %175 : vector<1x128xi1>
    %cst_56 = arith.constant 1.600000e+01 : f32
    %177 = vector.broadcast %cst_56 : f32 to vector<1x128xf32>
    %178 = arith.cmpf ogt, %168, %177 : vector<1x128xf32>
    %179 = arith.ori %176, %178 : vector<1x128xi1>
    %cst_57 = arith.constant 0.000000e+00 : f32
    %180 = vector.broadcast %cst_57 : f32 to vector<1x128xf32>
    %181 = arith.maximumf %59, %180 : vector<1x128xf32>
    %cst_58 = arith.constant 0.000000e+00 : f32
    %182 = vector.broadcast %cst_58 : f32 to vector<1x128xf32>
    %183 = arith.maximumf %168, %182 : vector<1x128xf32>
    %184 = arith.fptosi %181 : vector<1x128xf32> to vector<1x128xi32>
    %185 = arith.fptosi %183 : vector<1x128xf32> to vector<1x128xi32>
    %c15_i32_59 = arith.constant 15 : i32
    %186 = vector.broadcast %c15_i32_59 : i32 to vector<1x128xi32>
    %187 = arith.cmpi sge, %184, %186 : vector<1x128xi32>
    %c15_i32_60 = arith.constant 15 : i32
    %188 = vector.broadcast %c15_i32_60 : i32 to vector<1x128xi32>
    %189 = arith.cmpi sge, %185, %188 : vector<1x128xi32>
    %c1_i32_61 = arith.constant 1 : i32
    %190 = vector.broadcast %c1_i32_61 : i32 to vector<1x128xi32>
    %191 = arith.addi %184, %190 : vector<1x128xi32>
    %c15_i32_62 = arith.constant 15 : i32
    %192 = vector.broadcast %c15_i32_62 : i32 to vector<1x128xi32>
    %193 = arith.select %187, %192, %191 : vector<1x128xi1>, vector<1x128xi32>
    %c1_i32_63 = arith.constant 1 : i32
    %194 = vector.broadcast %c1_i32_63 : i32 to vector<1x128xi32>
    %195 = arith.addi %185, %194 : vector<1x128xi32>
    %c15_i32_64 = arith.constant 15 : i32
    %196 = vector.broadcast %c15_i32_64 : i32 to vector<1x128xi32>
    %197 = arith.select %189, %196, %195 : vector<1x128xi1>, vector<1x128xi32>
    %c15_i32_65 = arith.constant 15 : i32
    %198 = vector.broadcast %c15_i32_65 : i32 to vector<1x128xi32>
    %199 = arith.select %187, %198, %184 : vector<1x128xi1>, vector<1x128xi32>
    %c15_i32_66 = arith.constant 15 : i32
    %200 = vector.broadcast %c15_i32_66 : i32 to vector<1x128xi32>
    %201 = arith.select %189, %200, %185 : vector<1x128xi1>, vector<1x128xi32>
    %cst_67 = arith.constant 1.500000e+01 : f32
    %202 = vector.broadcast %cst_67 : f32 to vector<1x128xf32>
    %203 = arith.select %187, %202, %181 : vector<1x128xi1>, vector<1x128xf32>
    %cst_68 = arith.constant 1.500000e+01 : f32
    %204 = vector.broadcast %cst_68 : f32 to vector<1x128xf32>
    %205 = arith.select %189, %204, %183 : vector<1x128xi1>, vector<1x128xf32>
    %206 = arith.sitofp %199 : vector<1x128xi32> to vector<1x128xf32>
    %207 = arith.subf %203, %206 : vector<1x128xf32>
    %208 = arith.sitofp %201 : vector<1x128xi32> to vector<1x128xf32>
    %209 = arith.subf %205, %208 : vector<1x128xf32>
    %cst_69 = arith.constant 1.000000e+00 : f32
    %210 = vector.broadcast %cst_69 : f32 to vector<1x128xf32>
    %211 = arith.subf %210, %207 : vector<1x128xf32>
    %cst_70 = arith.constant 1.000000e+00 : f32
    %212 = vector.broadcast %cst_70 : f32 to vector<1x128xf32>
    %213 = arith.subf %212, %209 : vector<1x128xf32>
    %cst_71 = arith.constant 0.000000e+00 : f32
    %214 = vector.broadcast %cst_71 : f32 to vector<1x128xf32>
    %215 = arith.select %179, %214, %52 : vector<1x128xi1>, vector<1x128xf32>
    %216 = arith.mulf %211, %213 : vector<1x128xf32>
    %217 = arith.mulf %211, %209 : vector<1x128xf32>
    %218 = arith.mulf %207, %213 : vector<1x128xf32>
    %219 = arith.mulf %207, %209 : vector<1x128xf32>
    %c16_i32_72 = arith.constant 16 : i32
    %220 = vector.broadcast %c16_i32_72 : i32 to vector<1x128xi32>
    %221 = arith.muli %199, %220 : vector<1x128xi32>
    %222 = arith.addi %221, %201 : vector<1x128xi32>
    %223 = vector.broadcast %53 : vector<256x1xi32> to vector<256x128xi32>
    %224 = vector.broadcast %222 : vector<1x128xi32> to vector<256x128xi32>
    %225 = arith.cmpi eq, %223, %224 : vector<256x128xi32>
    %226 = arith.mulf %216, %215 : vector<1x128xf32>
    %cst_73 = arith.constant 0.000000e+00 : f32
    %227 = vector.shape_cast %226 : vector<1x128xf32> to vector<1x128xf32>
    %228 = vector.broadcast %227 : vector<1x128xf32> to vector<256x128xf32>
    %229 = vector.broadcast %cst_73 : f32 to vector<256x128xf32>
    %230 = arith.select %225, %228, %229 : vector<256x128xi1>, vector<256x128xf32>
    %231 = arith.addf %163, %230 : vector<256x128xf32>
    %c16_i32_74 = arith.constant 16 : i32
    %232 = vector.broadcast %c16_i32_74 : i32 to vector<1x128xi32>
    %233 = arith.muli %199, %232 : vector<1x128xi32>
    %234 = arith.addi %233, %197 : vector<1x128xi32>
    %235 = vector.broadcast %53 : vector<256x1xi32> to vector<256x128xi32>
    %236 = vector.broadcast %234 : vector<1x128xi32> to vector<256x128xi32>
    %237 = arith.cmpi eq, %235, %236 : vector<256x128xi32>
    %238 = arith.mulf %217, %215 : vector<1x128xf32>
    %cst_75 = arith.constant 0.000000e+00 : f32
    %239 = vector.shape_cast %238 : vector<1x128xf32> to vector<1x128xf32>
    %240 = vector.broadcast %239 : vector<1x128xf32> to vector<256x128xf32>
    %241 = vector.broadcast %cst_75 : f32 to vector<256x128xf32>
    %242 = arith.select %237, %240, %241 : vector<256x128xi1>, vector<256x128xf32>
    %243 = arith.addf %231, %242 : vector<256x128xf32>
    %c16_i32_76 = arith.constant 16 : i32
    %244 = vector.broadcast %c16_i32_76 : i32 to vector<1x128xi32>
    %245 = arith.muli %193, %244 : vector<1x128xi32>
    %246 = arith.addi %245, %201 : vector<1x128xi32>
    %247 = vector.broadcast %53 : vector<256x1xi32> to vector<256x128xi32>
    %248 = vector.broadcast %246 : vector<1x128xi32> to vector<256x128xi32>
    %249 = arith.cmpi eq, %247, %248 : vector<256x128xi32>
    %250 = arith.mulf %218, %215 : vector<1x128xf32>
    %cst_77 = arith.constant 0.000000e+00 : f32
    %251 = vector.shape_cast %250 : vector<1x128xf32> to vector<1x128xf32>
    %252 = vector.broadcast %251 : vector<1x128xf32> to vector<256x128xf32>
    %253 = vector.broadcast %cst_77 : f32 to vector<256x128xf32>
    %254 = arith.select %249, %252, %253 : vector<256x128xi1>, vector<256x128xf32>
    %255 = arith.addf %243, %254 : vector<256x128xf32>
    %c16_i32_78 = arith.constant 16 : i32
    %256 = vector.broadcast %c16_i32_78 : i32 to vector<1x128xi32>
    %257 = arith.muli %193, %256 : vector<1x128xi32>
    %258 = arith.addi %257, %197 : vector<1x128xi32>
    %259 = vector.broadcast %53 : vector<256x1xi32> to vector<256x128xi32>
    %260 = vector.broadcast %258 : vector<1x128xi32> to vector<256x128xi32>
    %261 = arith.cmpi eq, %259, %260 : vector<256x128xi32>
    %262 = arith.mulf %219, %215 : vector<1x128xf32>
    %cst_79 = arith.constant 0.000000e+00 : f32
    %263 = vector.shape_cast %262 : vector<1x128xf32> to vector<1x128xf32>
    %264 = vector.broadcast %263 : vector<1x128xf32> to vector<256x128xf32>
    %265 = vector.broadcast %cst_79 : f32 to vector<256x128xf32>
    %266 = arith.select %261, %264, %265 : vector<256x128xi1>, vector<256x128xf32>
    %267 = arith.addf %255, %266 : vector<256x128xf32>
    %cst_80 = arith.constant 1.500000e+00 : f32
    %268 = vector.broadcast %cst_80 : f32 to vector<1x128xf32>
    %269 = arith.mulf %268, %49 : vector<1x128xf32>
    %cst_81 = arith.constant 5.000000e-01 : f32
    %270 = vector.broadcast %cst_81 : f32 to vector<1x128xf32>
    %271 = arith.mulf %269, %270 : vector<1x128xf32>
    %272 = arith.addf %31, %271 : vector<1x128xf32>
    %cst_82 = arith.constant 5.000000e-01 : f32
    %273 = vector.broadcast %cst_82 : f32 to vector<1x128xf32>
    %274 = arith.mulf %273, %46 : vector<1x128xf32>
    %cst_83 = arith.constant 5.000000e-01 : f32
    %275 = vector.broadcast %cst_83 : f32 to vector<1x128xf32>
    %276 = arith.mulf %274, %275 : vector<1x128xf32>
    %277 = arith.addf %29, %276 : vector<1x128xf32>
    %cst_84 = arith.constant -1.000000e+00 : f32
    %278 = vector.broadcast %cst_84 : f32 to vector<1x128xf32>
    %279 = arith.cmpf olt, %272, %278 : vector<1x128xf32>
    %cst_85 = arith.constant 1.600000e+01 : f32
    %280 = vector.broadcast %cst_85 : f32 to vector<1x128xf32>
    %281 = arith.cmpf ogt, %272, %280 : vector<1x128xf32>
    %282 = arith.ori %279, %281 : vector<1x128xi1>
    %cst_86 = arith.constant -1.000000e+00 : f32
    %283 = vector.broadcast %cst_86 : f32 to vector<1x128xf32>
    %284 = arith.cmpf olt, %277, %283 : vector<1x128xf32>
    %285 = arith.ori %282, %284 : vector<1x128xi1>
    %cst_87 = arith.constant 1.600000e+01 : f32
    %286 = vector.broadcast %cst_87 : f32 to vector<1x128xf32>
    %287 = arith.cmpf ogt, %277, %286 : vector<1x128xf32>
    %288 = arith.ori %285, %287 : vector<1x128xi1>
    %cst_88 = arith.constant 0.000000e+00 : f32
    %289 = vector.broadcast %cst_88 : f32 to vector<1x128xf32>
    %290 = arith.maximumf %272, %289 : vector<1x128xf32>
    %cst_89 = arith.constant 0.000000e+00 : f32
    %291 = vector.broadcast %cst_89 : f32 to vector<1x128xf32>
    %292 = arith.maximumf %277, %291 : vector<1x128xf32>
    %293 = arith.fptosi %290 : vector<1x128xf32> to vector<1x128xi32>
    %294 = arith.fptosi %292 : vector<1x128xf32> to vector<1x128xi32>
    %c15_i32_90 = arith.constant 15 : i32
    %295 = vector.broadcast %c15_i32_90 : i32 to vector<1x128xi32>
    %296 = arith.cmpi sge, %293, %295 : vector<1x128xi32>
    %c15_i32_91 = arith.constant 15 : i32
    %297 = vector.broadcast %c15_i32_91 : i32 to vector<1x128xi32>
    %298 = arith.cmpi sge, %294, %297 : vector<1x128xi32>
    %c1_i32_92 = arith.constant 1 : i32
    %299 = vector.broadcast %c1_i32_92 : i32 to vector<1x128xi32>
    %300 = arith.addi %293, %299 : vector<1x128xi32>
    %c15_i32_93 = arith.constant 15 : i32
    %301 = vector.broadcast %c15_i32_93 : i32 to vector<1x128xi32>
    %302 = arith.select %296, %301, %300 : vector<1x128xi1>, vector<1x128xi32>
    %c1_i32_94 = arith.constant 1 : i32
    %303 = vector.broadcast %c1_i32_94 : i32 to vector<1x128xi32>
    %304 = arith.addi %294, %303 : vector<1x128xi32>
    %c15_i32_95 = arith.constant 15 : i32
    %305 = vector.broadcast %c15_i32_95 : i32 to vector<1x128xi32>
    %306 = arith.select %298, %305, %304 : vector<1x128xi1>, vector<1x128xi32>
    %c15_i32_96 = arith.constant 15 : i32
    %307 = vector.broadcast %c15_i32_96 : i32 to vector<1x128xi32>
    %308 = arith.select %296, %307, %293 : vector<1x128xi1>, vector<1x128xi32>
    %c15_i32_97 = arith.constant 15 : i32
    %309 = vector.broadcast %c15_i32_97 : i32 to vector<1x128xi32>
    %310 = arith.select %298, %309, %294 : vector<1x128xi1>, vector<1x128xi32>
    %cst_98 = arith.constant 1.500000e+01 : f32
    %311 = vector.broadcast %cst_98 : f32 to vector<1x128xf32>
    %312 = arith.select %296, %311, %290 : vector<1x128xi1>, vector<1x128xf32>
    %cst_99 = arith.constant 1.500000e+01 : f32
    %313 = vector.broadcast %cst_99 : f32 to vector<1x128xf32>
    %314 = arith.select %298, %313, %292 : vector<1x128xi1>, vector<1x128xf32>
    %315 = arith.sitofp %308 : vector<1x128xi32> to vector<1x128xf32>
    %316 = arith.subf %312, %315 : vector<1x128xf32>
    %317 = arith.sitofp %310 : vector<1x128xi32> to vector<1x128xf32>
    %318 = arith.subf %314, %317 : vector<1x128xf32>
    %cst_100 = arith.constant 1.000000e+00 : f32
    %319 = vector.broadcast %cst_100 : f32 to vector<1x128xf32>
    %320 = arith.subf %319, %316 : vector<1x128xf32>
    %cst_101 = arith.constant 1.000000e+00 : f32
    %321 = vector.broadcast %cst_101 : f32 to vector<1x128xf32>
    %322 = arith.subf %321, %318 : vector<1x128xf32>
    %cst_102 = arith.constant 0.000000e+00 : f32
    %323 = vector.broadcast %cst_102 : f32 to vector<1x128xf32>
    %324 = arith.select %288, %323, %52 : vector<1x128xi1>, vector<1x128xf32>
    %325 = arith.mulf %320, %322 : vector<1x128xf32>
    %326 = arith.mulf %320, %318 : vector<1x128xf32>
    %327 = arith.mulf %316, %322 : vector<1x128xf32>
    %328 = arith.mulf %316, %318 : vector<1x128xf32>
    %c16_i32_103 = arith.constant 16 : i32
    %329 = vector.broadcast %c16_i32_103 : i32 to vector<1x128xi32>
    %330 = arith.muli %308, %329 : vector<1x128xi32>
    %331 = arith.addi %330, %310 : vector<1x128xi32>
    %332 = vector.broadcast %53 : vector<256x1xi32> to vector<256x128xi32>
    %333 = vector.broadcast %331 : vector<1x128xi32> to vector<256x128xi32>
    %334 = arith.cmpi eq, %332, %333 : vector<256x128xi32>
    %335 = arith.mulf %325, %324 : vector<1x128xf32>
    %cst_104 = arith.constant 0.000000e+00 : f32
    %336 = vector.shape_cast %335 : vector<1x128xf32> to vector<1x128xf32>
    %337 = vector.broadcast %336 : vector<1x128xf32> to vector<256x128xf32>
    %338 = vector.broadcast %cst_104 : f32 to vector<256x128xf32>
    %339 = arith.select %334, %337, %338 : vector<256x128xi1>, vector<256x128xf32>
    %340 = arith.addf %267, %339 : vector<256x128xf32>
    %c16_i32_105 = arith.constant 16 : i32
    %341 = vector.broadcast %c16_i32_105 : i32 to vector<1x128xi32>
    %342 = arith.muli %308, %341 : vector<1x128xi32>
    %343 = arith.addi %342, %306 : vector<1x128xi32>
    %344 = vector.broadcast %53 : vector<256x1xi32> to vector<256x128xi32>
    %345 = vector.broadcast %343 : vector<1x128xi32> to vector<256x128xi32>
    %346 = arith.cmpi eq, %344, %345 : vector<256x128xi32>
    %347 = arith.mulf %326, %324 : vector<1x128xf32>
    %cst_106 = arith.constant 0.000000e+00 : f32
    %348 = vector.shape_cast %347 : vector<1x128xf32> to vector<1x128xf32>
    %349 = vector.broadcast %348 : vector<1x128xf32> to vector<256x128xf32>
    %350 = vector.broadcast %cst_106 : f32 to vector<256x128xf32>
    %351 = arith.select %346, %349, %350 : vector<256x128xi1>, vector<256x128xf32>
    %352 = arith.addf %340, %351 : vector<256x128xf32>
    %c16_i32_107 = arith.constant 16 : i32
    %353 = vector.broadcast %c16_i32_107 : i32 to vector<1x128xi32>
    %354 = arith.muli %302, %353 : vector<1x128xi32>
    %355 = arith.addi %354, %310 : vector<1x128xi32>
    %356 = vector.broadcast %53 : vector<256x1xi32> to vector<256x128xi32>
    %357 = vector.broadcast %355 : vector<1x128xi32> to vector<256x128xi32>
    %358 = arith.cmpi eq, %356, %357 : vector<256x128xi32>
    %359 = arith.mulf %327, %324 : vector<1x128xf32>
    %cst_108 = arith.constant 0.000000e+00 : f32
    %360 = vector.shape_cast %359 : vector<1x128xf32> to vector<1x128xf32>
    %361 = vector.broadcast %360 : vector<1x128xf32> to vector<256x128xf32>
    %362 = vector.broadcast %cst_108 : f32 to vector<256x128xf32>
    %363 = arith.select %358, %361, %362 : vector<256x128xi1>, vector<256x128xf32>
    %364 = arith.addf %352, %363 : vector<256x128xf32>
    %c16_i32_109 = arith.constant 16 : i32
    %365 = vector.broadcast %c16_i32_109 : i32 to vector<1x128xi32>
    %366 = arith.muli %302, %365 : vector<1x128xi32>
    %367 = arith.addi %366, %306 : vector<1x128xi32>
    %368 = vector.broadcast %53 : vector<256x1xi32> to vector<256x128xi32>
    %369 = vector.broadcast %367 : vector<1x128xi32> to vector<256x128xi32>
    %370 = arith.cmpi eq, %368, %369 : vector<256x128xi32>
    %371 = arith.mulf %328, %324 : vector<1x128xf32>
    %cst_110 = arith.constant 0.000000e+00 : f32
    %372 = vector.shape_cast %371 : vector<1x128xf32> to vector<1x128xf32>
    %373 = vector.broadcast %372 : vector<1x128xf32> to vector<256x128xf32>
    %374 = vector.broadcast %cst_110 : f32 to vector<256x128xf32>
    %375 = arith.select %370, %373, %374 : vector<256x128xi1>, vector<256x128xf32>
    %376 = arith.addf %364, %375 : vector<256x128xf32>
    %cst_111 = arith.constant 1.500000e+00 : f32
    %377 = vector.broadcast %cst_111 : f32 to vector<1x128xf32>
    %378 = arith.mulf %377, %46 : vector<1x128xf32>
    %cst_112 = arith.constant 5.000000e-01 : f32
    %379 = vector.broadcast %cst_112 : f32 to vector<1x128xf32>
    %380 = arith.mulf %378, %379 : vector<1x128xf32>
    %381 = arith.addf %29, %380 : vector<1x128xf32>
    %cst_113 = arith.constant -1.000000e+00 : f32
    %382 = vector.broadcast %cst_113 : f32 to vector<1x128xf32>
    %383 = arith.cmpf olt, %272, %382 : vector<1x128xf32>
    %cst_114 = arith.constant 1.600000e+01 : f32
    %384 = vector.broadcast %cst_114 : f32 to vector<1x128xf32>
    %385 = arith.cmpf ogt, %272, %384 : vector<1x128xf32>
    %386 = arith.ori %383, %385 : vector<1x128xi1>
    %cst_115 = arith.constant -1.000000e+00 : f32
    %387 = vector.broadcast %cst_115 : f32 to vector<1x128xf32>
    %388 = arith.cmpf olt, %381, %387 : vector<1x128xf32>
    %389 = arith.ori %386, %388 : vector<1x128xi1>
    %cst_116 = arith.constant 1.600000e+01 : f32
    %390 = vector.broadcast %cst_116 : f32 to vector<1x128xf32>
    %391 = arith.cmpf ogt, %381, %390 : vector<1x128xf32>
    %392 = arith.ori %389, %391 : vector<1x128xi1>
    %cst_117 = arith.constant 0.000000e+00 : f32
    %393 = vector.broadcast %cst_117 : f32 to vector<1x128xf32>
    %394 = arith.maximumf %272, %393 : vector<1x128xf32>
    %cst_118 = arith.constant 0.000000e+00 : f32
    %395 = vector.broadcast %cst_118 : f32 to vector<1x128xf32>
    %396 = arith.maximumf %381, %395 : vector<1x128xf32>
    %397 = arith.fptosi %394 : vector<1x128xf32> to vector<1x128xi32>
    %398 = arith.fptosi %396 : vector<1x128xf32> to vector<1x128xi32>
    %c15_i32_119 = arith.constant 15 : i32
    %399 = vector.broadcast %c15_i32_119 : i32 to vector<1x128xi32>
    %400 = arith.cmpi sge, %397, %399 : vector<1x128xi32>
    %c15_i32_120 = arith.constant 15 : i32
    %401 = vector.broadcast %c15_i32_120 : i32 to vector<1x128xi32>
    %402 = arith.cmpi sge, %398, %401 : vector<1x128xi32>
    %c1_i32_121 = arith.constant 1 : i32
    %403 = vector.broadcast %c1_i32_121 : i32 to vector<1x128xi32>
    %404 = arith.addi %397, %403 : vector<1x128xi32>
    %c15_i32_122 = arith.constant 15 : i32
    %405 = vector.broadcast %c15_i32_122 : i32 to vector<1x128xi32>
    %406 = arith.select %400, %405, %404 : vector<1x128xi1>, vector<1x128xi32>
    %c1_i32_123 = arith.constant 1 : i32
    %407 = vector.broadcast %c1_i32_123 : i32 to vector<1x128xi32>
    %408 = arith.addi %398, %407 : vector<1x128xi32>
    %c15_i32_124 = arith.constant 15 : i32
    %409 = vector.broadcast %c15_i32_124 : i32 to vector<1x128xi32>
    %410 = arith.select %402, %409, %408 : vector<1x128xi1>, vector<1x128xi32>
    %c15_i32_125 = arith.constant 15 : i32
    %411 = vector.broadcast %c15_i32_125 : i32 to vector<1x128xi32>
    %412 = arith.select %400, %411, %397 : vector<1x128xi1>, vector<1x128xi32>
    %c15_i32_126 = arith.constant 15 : i32
    %413 = vector.broadcast %c15_i32_126 : i32 to vector<1x128xi32>
    %414 = arith.select %402, %413, %398 : vector<1x128xi1>, vector<1x128xi32>
    %cst_127 = arith.constant 1.500000e+01 : f32
    %415 = vector.broadcast %cst_127 : f32 to vector<1x128xf32>
    %416 = arith.select %400, %415, %394 : vector<1x128xi1>, vector<1x128xf32>
    %cst_128 = arith.constant 1.500000e+01 : f32
    %417 = vector.broadcast %cst_128 : f32 to vector<1x128xf32>
    %418 = arith.select %402, %417, %396 : vector<1x128xi1>, vector<1x128xf32>
    %419 = arith.sitofp %412 : vector<1x128xi32> to vector<1x128xf32>
    %420 = arith.subf %416, %419 : vector<1x128xf32>
    %421 = arith.sitofp %414 : vector<1x128xi32> to vector<1x128xf32>
    %422 = arith.subf %418, %421 : vector<1x128xf32>
    %cst_129 = arith.constant 1.000000e+00 : f32
    %423 = vector.broadcast %cst_129 : f32 to vector<1x128xf32>
    %424 = arith.subf %423, %420 : vector<1x128xf32>
    %cst_130 = arith.constant 1.000000e+00 : f32
    %425 = vector.broadcast %cst_130 : f32 to vector<1x128xf32>
    %426 = arith.subf %425, %422 : vector<1x128xf32>
    %cst_131 = arith.constant 0.000000e+00 : f32
    %427 = vector.broadcast %cst_131 : f32 to vector<1x128xf32>
    %428 = arith.select %392, %427, %52 : vector<1x128xi1>, vector<1x128xf32>
    %429 = arith.mulf %424, %426 : vector<1x128xf32>
    %430 = arith.mulf %424, %422 : vector<1x128xf32>
    %431 = arith.mulf %420, %426 : vector<1x128xf32>
    %432 = arith.mulf %420, %422 : vector<1x128xf32>
    %c16_i32_132 = arith.constant 16 : i32
    %433 = vector.broadcast %c16_i32_132 : i32 to vector<1x128xi32>
    %434 = arith.muli %412, %433 : vector<1x128xi32>
    %435 = arith.addi %434, %414 : vector<1x128xi32>
    %436 = vector.broadcast %53 : vector<256x1xi32> to vector<256x128xi32>
    %437 = vector.broadcast %435 : vector<1x128xi32> to vector<256x128xi32>
    %438 = arith.cmpi eq, %436, %437 : vector<256x128xi32>
    %439 = arith.mulf %429, %428 : vector<1x128xf32>
    %cst_133 = arith.constant 0.000000e+00 : f32
    %440 = vector.shape_cast %439 : vector<1x128xf32> to vector<1x128xf32>
    %441 = vector.broadcast %440 : vector<1x128xf32> to vector<256x128xf32>
    %442 = vector.broadcast %cst_133 : f32 to vector<256x128xf32>
    %443 = arith.select %438, %441, %442 : vector<256x128xi1>, vector<256x128xf32>
    %444 = arith.addf %376, %443 : vector<256x128xf32>
    %c16_i32_134 = arith.constant 16 : i32
    %445 = vector.broadcast %c16_i32_134 : i32 to vector<1x128xi32>
    %446 = arith.muli %412, %445 : vector<1x128xi32>
    %447 = arith.addi %446, %410 : vector<1x128xi32>
    %448 = vector.broadcast %53 : vector<256x1xi32> to vector<256x128xi32>
    %449 = vector.broadcast %447 : vector<1x128xi32> to vector<256x128xi32>
    %450 = arith.cmpi eq, %448, %449 : vector<256x128xi32>
    %451 = arith.mulf %430, %428 : vector<1x128xf32>
    %cst_135 = arith.constant 0.000000e+00 : f32
    %452 = vector.shape_cast %451 : vector<1x128xf32> to vector<1x128xf32>
    %453 = vector.broadcast %452 : vector<1x128xf32> to vector<256x128xf32>
    %454 = vector.broadcast %cst_135 : f32 to vector<256x128xf32>
    %455 = arith.select %450, %453, %454 : vector<256x128xi1>, vector<256x128xf32>
    %456 = arith.addf %444, %455 : vector<256x128xf32>
    %c16_i32_136 = arith.constant 16 : i32
    %457 = vector.broadcast %c16_i32_136 : i32 to vector<1x128xi32>
    %458 = arith.muli %406, %457 : vector<1x128xi32>
    %459 = arith.addi %458, %414 : vector<1x128xi32>
    %460 = vector.broadcast %53 : vector<256x1xi32> to vector<256x128xi32>
    %461 = vector.broadcast %459 : vector<1x128xi32> to vector<256x128xi32>
    %462 = arith.cmpi eq, %460, %461 : vector<256x128xi32>
    %463 = arith.mulf %431, %428 : vector<1x128xf32>
    %cst_137 = arith.constant 0.000000e+00 : f32
    %464 = vector.shape_cast %463 : vector<1x128xf32> to vector<1x128xf32>
    %465 = vector.broadcast %464 : vector<1x128xf32> to vector<256x128xf32>
    %466 = vector.broadcast %cst_137 : f32 to vector<256x128xf32>
    %467 = arith.select %462, %465, %466 : vector<256x128xi1>, vector<256x128xf32>
    %468 = arith.addf %456, %467 : vector<256x128xf32>
    %c16_i32_138 = arith.constant 16 : i32
    %469 = vector.broadcast %c16_i32_138 : i32 to vector<1x128xi32>
    %470 = arith.muli %406, %469 : vector<1x128xi32>
    %471 = arith.addi %470, %410 : vector<1x128xi32>
    %472 = vector.broadcast %53 : vector<256x1xi32> to vector<256x128xi32>
    %473 = vector.broadcast %471 : vector<1x128xi32> to vector<256x128xi32>
    %474 = arith.cmpi eq, %472, %473 : vector<256x128xi32>
    %475 = arith.mulf %432, %428 : vector<1x128xf32>
    %cst_139 = arith.constant 0.000000e+00 : f32
    %476 = vector.shape_cast %475 : vector<1x128xf32> to vector<1x128xf32>
    %477 = vector.broadcast %476 : vector<1x128xf32> to vector<256x128xf32>
    %478 = vector.broadcast %cst_139 : f32 to vector<256x128xf32>
    %479 = arith.select %474, %477, %478 : vector<256x128xi1>, vector<256x128xf32>
    %480 = arith.addf %468, %479 : vector<256x128xf32>
    %c0_140 = arith.constant 0 : index
    %c0_141 = arith.constant 0 : index
    %481 = vector.load %arg1[%c0_140, %c0_141] : memref<8x256xf32, #tpu.memory_space<vmem>>, vector<8x256xf32>
    %482 = arith.truncf %481 : vector<8x256xf32> to vector<8x256xbf16>
    %483 = arith.truncf %480 : vector<256x128xf32> to vector<256x128xbf16>
    %cst_142 = arith.constant dense<0.000000e+00> : vector<8x128xf32>
    %484 = tpu.matmul %482, %483, %cst_142 {dimension_numbers = #tpu.dot_dimension_numbers<[1], [0], [0], [1], [0, 0, 1, 1], [], []>} : vector<8x256xbf16>, vector<256x128xbf16>, vector<8x128xf32> -> vector<8x128xf32>
    %c0_143 = arith.constant 0 : index
    %c0_144 = arith.constant 0 : index
    %485 = vector.load %arg5[%c0_143, %c0_144] : memref<8x128xf32, #tpu.memory_space<vmem>>, vector<8x128xf32>
    tpu.vector_store %arg5[%c0_143, %c0_144], %484 {strides = array<i32>} : memref<8x128xf32, #tpu.memory_space<vmem>>, vector<8x128xf32>,
    return
  }
  func.func @transform_0(%arg0: i32) -> (i32, i32) {
    %c0_i32 = arith.constant 0 : i32
    %c0_i32_0 = arith.constant 0 : i32
    %c0_i32_1 = arith.constant 0 : i32
    return %c0_i32, %c0_i32_0 : i32, i32
  }
  func.func @transform_1(%arg0: i32) -> (i32, i32) {
    %c0_i32 = arith.constant 0 : i32
    %c0_i32_0 = arith.constant 0 : i32
    return %c0_i32, %arg0 : i32, i32
  }
  func.func @transform_2(%arg0: i32) -> (i32, i32) {
    %c0_i32 = arith.constant 0 : i32
    %c0_i32_0 = arith.constant 0 : i32
    return %c0_i32, %arg0 : i32, i32
  }
  func.func @transform_3(%arg0: i32) -> i32 {
    %c0_i32 = arith.constant 0 : i32
    %c0_i32_0 = arith.constant 0 : i32
    return %c0_i32 : i32
  }
  func.func @transform_4(%arg0: i32) -> (i32, i32) {
    %c0_i32 = arith.constant 0 : i32
    %c0_i32_0 = arith.constant 0 : i32
    return %c0_i32, %arg0 : i32, i32
  }
}

</mosaic_0001>

<llo_original>
// kernel: tpu_custom_call.1
$region0: #{tpu_custom_call.1}
  #allocation0 [shape = 'u32[]', space=smem, size = 0x4, offset = 0x4, fixed_abs, tag = 'smem constant byte address 0x4 - core index']
  #allocation1 [shape = 'u32[144,128]{1,0:T(1,128)}', space=vmem, size = 0x12000, scoped, tag = 'internal scratch']
  #allocation2 [shape = 'f32[1]{0:T(128)S(6)}', space=smem, size = 0x200, scoped, tag = 'scoped memory for tpu_custom_call.1']
  %s0 = inlined_call_operand.hbm [shape: f32[8,256], index: 0, kind: input, shape index: {}]
  %s1 = inlined_call_operand.hbm [shape: f32[4,256], index: 1, kind: input, shape index: {}]
  %s2 = inlined_call_operand.vmem [shape: f32[1,256], index: 2, kind: input, shape index: {}]
  %s3 = inlined_call_operand.<no memory space> [shape: f32[1], index: 3, kind: input, shape index: {}]
  %s4 = inlined_call_operand.hbm [shape: f32[8,256], index: 4, kind: output, shape index: {}]
  %s5 = sld [smem:[#allocation0]]
  $region57: #{tpu_custom_call.1} parent=0
    _
  %s7 = ssub.s32 1, %s5
  %s8 = scalar_select 0, %s7, %s5
  %9 = sst [smem:[#allocation2]] %s3
  $region1: #{tpu_custom_call.1} parent=0
    #allocation3 [shape = 'u8[8192]{0}', space=vmem, size = 0x2000, scoped, tag = 'input window, operand 0, single buffered']
    #allocation4 [shape = 's32[2]{0}', space=sflag, size = 0x8, scoped, tag = 'scoped memory for tpu_custom_call.1']
    #allocation5 [shape = 's32[2]{0}', space=sflag, size = 0x8, scoped, tag = 'scoped memory for tpu_custom_call.1']
    #allocation6 [shape = 'u8[4096]{0}', space=vmem, size = 0x1000, scoped, tag = 'input window, operand 1']
    #allocation7 [shape = 's32[2]{0}', space=sflag, size = 0x8, scoped, tag = 'scoped memory for tpu_custom_call.1']
    #allocation8 [shape = 'u8[8192]{0}', space=vmem, size = 0x2000, scoped, tag = 'output window, operand 0']
    %10 = vsyncpa [#allocation4], 0
    %11 = vsyncpa [#allocation7], 0
    %s12 = scalar_lea.sflag [#allocation7], 1
    %13 = vsyncpa %s12, 0
    %14 = vsyncpa [#allocation5], 0
    %s15 = scalar_lea.sflag [#allocation5], 1
    %16 = vsyncpa %s15, 0
    loop: start=0, step=1, limit=4
    $region2: #{tpu_custom_call.1} parent=1 // loop_pre_header
      _
    $region3: #{tpu_custom_call.1} parent=1 // loop_header
      %s18 = sphi 0, %s22
      %p19 = scmp.ge.s32.totalorder %s18, 4
      %s26 = sphi 0, %s26
      %s28 = sphi 0, %s26
      %s29 = sphi 0, %s28
      %s43 = sphi 0, %s29
      %s49 = sphi 0, %s51
      %s52 = sphi 0, %s49
      %s53 = sphi 0, %s52
      %s69 = sphi 0, %s53
      %s75 = sphi 0, %s77
      %s78 = sphi 0, %s75
      %s79 = sphi 0, %s78
      %s95 = sphi 0, %s79
      %s99 = sphi 0, %s99
      %s101 = sphi 0, %s99
      %s102 = sphi 0, %s101
      %s116 = sphi 0, %s102
      %s122 = sphi 0, %s124
      %s125 = sphi 0, %s122
      %s126 = sphi 0, %s125
      %s142 = sphi 0, %s126
    $region4: #{tpu_custom_call.1} parent=1 // loop_header_branch
      %21 = sbr.rel (%p19) target = $region8
    $region5: #{tpu_custom_call.1} parent=1 // loop_body
      %s23 = ssub.s32 %s18, 1
      %s24 = ssub.s32 %s18, 2
      %s25 = sadd.s32 %s18, 1
      %s27 = sadd.s32 %s26, 1
      %p30 = scmp.eq.s32.totalorder %s18, 1
      %p31 = scmp.ne.s32.totalorder %s26, %s28
      %p32 = scmp.eq.s32.totalorder %s18, 0
      %p33 = por %p31, %p32
      %p34 = scmp.ne.s32.totalorder %s26, %s28
      %p35 = scmp.eq.s32.totalorder %s23, 1
      %p36 = por %p34, %p35
      %p37 = scmp.ne.s32.totalorder %s28, %s29
      %p38 = scmp.eq.s32.totalorder %s23, 0
      %p39 = por %p37, %p38
      %p40 = scmp.ne.s32.totalorder %s28, %s29
      %p41 = scmp.eq.s32.totalorder %s24, 1
      %p42 = por %p40, %p41
      %p44 = scmp.ne.s32.totalorder %s29, %s43
      %p45 = scmp.eq.s32.totalorder %s24, 0
      %p46 = por %p44, %p45
      %s47 = ssub.s32 %s18, %s25
      %p48 = scmp.eq.s32.totalorder %s47, 0
      %s50 = sadd.s32 %s49, 1
      %s51 = scalar_select %p48, %s49, %s50
      %p54 = pneg %p48
      %p55 = scmp.eq.s32.totalorder %s18, 1
      %p56 = por %p54, %p55
      %p57 = scmp.ne.s32.totalorder %s49, %s52
      %p58 = scmp.eq.s32.totalorder %s18, 0
      %p59 = por %p57, %p58
      %p60 = scmp.ne.s32.totalorder %s49, %s52
      %p61 = scmp.eq.s32.totalorder %s23, 1
      %p62 = por %p60, %p61
      %p63 = scmp.ne.s32.totalorder %s52, %s53
      %p64 = scmp.eq.s32.totalorder %s23, 0
      %p65 = por %p63, %p64
      %p66 = scmp.ne.s32.totalorder %s52, %s53
      %p67 = scmp.eq.s32.totalorder %s24, 1
      %p68 = por %p66, %p67
      %p70 = scmp.ne.s32.totalorder %s53, %s69
      %p71 = scmp.eq.s32.totalorder %s24, 0
      %p72 = por %p70, %p71
      %s73 = ssub.s32 %s18, %s25
      %p74 = scmp.eq.s32.totalorder %s73, 0
      %s76 = sadd.s32 %s75, 1
      %s77 = scalar_select %p74, %s75, %s76
      %p80 = pneg %p74
      %p81 = scmp.eq.s32.totalorder %s18, 1
      %p82 = por %p80, %p81
      %p83 = scmp.ne.s32.totalorder %s75, %s78
      %p84 = scmp.eq.s32.totalorder %s18, 0
      %p85 = por %p83, %p84
      %p86 = scmp.ne.s32.totalorder %s75, %s78
      %p87 = scmp.eq.s32.totalorder %s23, 1
      %p88 = por %p86, %p87
      %p89 = scmp.ne.s32.totalorder %s78, %s79
      %p90 = scmp.eq.s32.totalorder %s23, 0
      %p91 = por %p89, %p90
      %p92 = scmp.ne.s32.totalorder %s78, %s79
      %p93 = scmp.eq.s32.totalorder %s24, 1
      %p94 = por %p92, %p93
      %p96 = scmp.ne.s32.totalorder %s79, %s95
      %p97 = scmp.eq.s32.totalorder %s24, 0
      %p98 = por %p96, %p97
      %s100 = sadd.s32 %s99, 1
      %p103 = scmp.eq.s32.totalorder %s18, 1
      %p104 = scmp.ne.s32.totalorder %s99, %s101
      %p105 = scmp.eq.s32.totalorder %s18, 0
      %p106 = por %p104, %p105
      %p107 = scmp.ne.s32.totalorder %s99, %s101
      %p108 = scmp.eq.s32.totalorder %s23, 1
      %p109 = por %p107, %p108
      %p110 = scmp.ne.s32.totalorder %s101, %s102
      %p111 = scmp.eq.s32.totalorder %s23, 0
      %p112 = por %p110, %p111
      %p113 = scmp.ne.s32.totalorder %s101, %s102
      %p114 = scmp.eq.s32.totalorder %s24, 1
      %p115 = por %p113, %p114
      %p117 = scmp.ne.s32.totalorder %s102, %s116
      %p118 = scmp.eq.s32.totalorder %s24, 0
      %p119 = por %p117, %p118
      %s120 = ssub.s32 %s18, %s25
      %p121 = scmp.eq.s32.totalorder %s120, 0
      %s123 = sadd.s32 %s122, 1
      %s124 = scalar_select %p121, %s122, %s123
      %p127 = pneg %p121
      %p128 = scmp.eq.s32.totalorder %s18, 1
      %p129 = por %p127, %p128
      %p130 = scmp.ne.s32.totalorder %s122, %s125
      %p131 = scmp.eq.s32.totalorder %s18, 0
      %p132 = por %p130, %p131
      %p133 = scmp.ne.s32.totalorder %s122, %s125
      %p134 = scmp.eq.s32.totalorder %s23, 1
      %p135 = por %p133, %p134
      %p136 = scmp.ne.s32.totalorder %s125, %s126
      %p137 = scmp.eq.s32.totalorder %s23, 0
      %p138 = por %p136, %p137
      %p139 = scmp.ne.s32.totalorder %s125, %s126
      %p140 = scmp.eq.s32.totalorder %s24, 1
      %p141 = por %p139, %p140
      %p143 = scmp.ne.s32.totalorder %s126, %s142
      %p144 = scmp.eq.s32.totalorder %s24, 0
      %p145 = por %p143, %p144
      %p146 = scmp.le.s32.totalorder 1, %s18
      %p147 = scmp.lt.s32.totalorder %s18, 3
      %p148 = pnand %p146, %p147
      %p149 = pneg %p148
      // Predicated region
      $region9: #{tpu_custom_call.1} parent=5 // pred_check
        _
      $region10: #{tpu_custom_call.1} parent=5 // pred_check_branch
        %151 = sbr.rel (%p148) target = $region12
      $region11: #{tpu_custom_call.1} parent=5 // pred_region
        %s152 = ssub.s32 %s18, 1
        // Predicated region
        $region13: #{tpu_custom_call.1} parent=11 // pred_check
          %p153 = pneg %p39
        $region14: #{tpu_custom_call.1} parent=11 // pred_check_branch
          %155 = sbr.rel (%p153) target = $region16
        $region15: #{tpu_custom_call.1} parent=11 // pred_region
          %s157 = ssub.s32 256, 256
          %158 = vsyncadd [#allocation4], %s157
          %s160 = sshll.u32 [#allocation3], 4
          %s161 = int_to_ptr.vmem [resolvable:$true] %s160
          %163 = dma.hbm_to_vmem [thread:$0]  %s0, 256, %s161, [#allocation4]
        $region16: #{tpu_custom_call.1} parent=11 // pred_fallthru
          _
        // Predicated region
        $region17: #{tpu_custom_call.1} parent=11 // pred_check
          %p164 = pneg %p112
        $region18: #{tpu_custom_call.1} parent=11 // pred_check_branch
          %166 = sbr.rel (%p164) target = $region20
        $region19: #{tpu_custom_call.1} parent=11 // pred_region
          _
        $region20: #{tpu_custom_call.1} parent=11 // pred_fallthru
          _
      $region12: #{tpu_custom_call.1} parent=5 // pred_fallthru
        _
      %p167 = scmp.lt.s32.totalorder %s18, 2
      // Predicated region
      $region21: #{tpu_custom_call.1} parent=5 // pred_check
        %p168 = pneg %p167
      $region22: #{tpu_custom_call.1} parent=5 // pred_check_branch
        %170 = sbr.rel (%p168) target = $region24
      $region23: #{tpu_custom_call.1} parent=5 // pred_region
        // Predicated region
        $region25: #{tpu_custom_call.1} parent=23 // pred_check
          %p171 = pneg %p59
        $region26: #{tpu_custom_call.1} parent=23 // pred_check_branch
          %173 = sbr.rel (%p171) target = $region28
        $region27: #{tpu_custom_call.1} parent=23 // pred_region
          %s174 = sand.u32 %s49, 1
          %s175 = scalar_lea.sflag [#allocation7], %s174
          %s176 = sand.u32 %s49, 1
          %s177 = smul.addr %s176, 4
          %s178 = scalar_lea.vmem [#allocation6], %s177
          %s180 = ssub.s32 64, 64
          %181 = vsyncadd %s175, %s180
          %s182 = smul.addr %s18, 64
          %s183 = scalar_lea.hbm %s1, %s182
          %s185 = sshll.u32 %s178, 4
          %s186 = int_to_ptr.vmem [resolvable:$true] %s185
          %188 = dma.hbm_to_vmem [thread:$0]  %s183, 64, %s186, %s175
        $region28: #{tpu_custom_call.1} parent=23 // pred_fallthru
          _
        // Predicated region
        $region29: #{tpu_custom_call.1} parent=23 // pred_check
          %p189 = pneg %p85
        $region30: #{tpu_custom_call.1} parent=23 // pred_check_branch
          %191 = sbr.rel (%p189) target = $region32
        $region31: #{tpu_custom_call.1} parent=23 // pred_region
          %p192 = scmp.lt.s32.totalorder %s18, 1
          %s193 = scalar_select %p192, %s18, 1
          %s194 = scalar_lea.vmem %s2, %s193
        $region32: #{tpu_custom_call.1} parent=23 // pred_fallthru
          _
      $region24: #{tpu_custom_call.1} parent=5 // pred_fallthru
        _
      %p195 = scmp.le.s32.totalorder 1, %s18
      %p196 = scmp.lt.s32.totalorder %s18, 3
      %p197 = pnand %p195, %p196
      %p198 = pneg %p197
      // Predicated region
      $region33: #{tpu_custom_call.1} parent=5 // pred_check
        _
      $region34: #{tpu_custom_call.1} parent=5 // pred_check_branch
        %200 = sbr.rel (%p197) target = $region36
      $region35: #{tpu_custom_call.1} parent=5 // pred_region
        %s201 = ssub.s32 %s18, 1
        // Predicated region
        $region37: #{tpu_custom_call.1} parent=35 // pred_check
          %p202 = pneg %p39
        $region38: #{tpu_custom_call.1} parent=35 // pred_check_branch
          %204 = sbr.rel (%p202) target = $region40
        $region39: #{tpu_custom_call.1} parent=35 // pred_region
          %205 = dma.done [#allocation4], 256
        $region40: #{tpu_custom_call.1} parent=35 // pred_fallthru
          _
        %s206 = sand.u32 %s52, 1
        %s207 = scalar_lea.sflag [#allocation7], %s206
        %s208 = sand.u32 %s52, 1
        %s209 = smul.addr %s208, 4
        %s210 = scalar_lea.vmem [#allocation6], %s209
        // Predicated region
        $region41: #{tpu_custom_call.1} parent=35 // pred_check
          %p211 = pneg %p65
        $region42: #{tpu_custom_call.1} parent=35 // pred_check_branch
          %213 = sbr.rel (%p211) target = $region44
        $region43: #{tpu_custom_call.1} parent=35 // pred_region
          %214 = dma.done %s207, 64
        $region44: #{tpu_custom_call.1} parent=35 // pred_fallthru
          _
        %p215 = pneg %p39
        %p216 = pneg %p36
        %s217 = sand.u32 %s52, 1
        %s218 = scalar_lea.sflag [#allocation7], %s217
        %s219 = sand.u32 %s52, 1
        %s220 = smul.addr %s219, 4
        %s221 = scalar_lea.vmem [#allocation6], %s220
        %p222 = pneg %p65
        %p223 = pneg %p62
        %p224 = scmp.lt.s32.totalorder %s23, 1
        %s225 = scalar_select %p224, %s23, 1
        %s226 = scalar_lea.vmem %s2, %s225
        %p227 = pneg %p91
        %p228 = pneg %p88
        %p229 = pneg %p112
        %p230 = pneg %p109
        %p231 = pneg %p138
        %p232 = pneg %p135
        %s233 = sand.u32 %s125, 1
        %s234 = scalar_lea.sflag [#allocation5], %s233
        %s235 = sand.u32 %s125, 1
        %s236 = smul.addr %s235, 8
        %s237 = scalar_lea.vmem [#allocation8], %s236
        %p238 = scmp.lt.s32.totalorder %s23, 1
        %s239 = scalar_select %p238, %s23, 1
        %s240 = scalar_lea.vmem %s2, %s239
        %s242 = sld [smem:[#allocation2]]
        %v243 = vstv %s242
        %v244 = vrcp.pop %v243
        %s245 = vtos %v244
        %v246 = vld [vmem:[%s210] sm:$0x1]
        %v247 = vstv %s245
        %v248 = vmul.f32 %v246, %v247
        %v249 = vld [vmem:[%s210 + $0x1] sm:$0x1]
        %v250 = vmul.f32 %v249, %v247
        %v251 = vld [vmem:[%s210 + $0x2] sm:$0x1]
        %v252 = vmul.f32 %v251, %v247
        %v253 = vld [vmem:[%s210 + $0x3] sm:$0x1]
        %v254 = vmul.f32 %v253, %v247
        %vm255 = vcmp.eq.f32.partialorder %v248, %v252
        %vm256 = vcmp.eq.f32.partialorder %v250, %v254
        %v257 = vsub.f32 %v248, 1.0
        %v258 = vsel %vm255, %v257, %v248
        %v259 = vadd.f32 %v252, 1.0
        %v260 = vsel %vm255, %v259, %v252
        %v261 = vsub.f32 %v250, 1.0
        %v262 = vsel %vm256, %v261, %v250
        %v263 = vadd.f32 %v254, 1.0
        %v264 = vsel %vm256, %v263, %v254
        %v265 = vmax.f32 %v258, 0.0
        %v266 = vmax.f32 %v262, 0.0
        %v267 = vmax.f32 %v260, 0.0
        %v268 = vmax.f32 %v264, 0.0
        %vm269 = vcmp.ge.f32.partialorder %v267, 16.0
        %v270 = vsel %vm269, 15.0, %v267
        %vm271 = vcmp.ge.f32.partialorder %v268, 16.0
        %v272 = vsel %vm271, 15.0, %v268
        %v273 = vsub.f32 %v270, %v265
        %v274 = vmax.f32 %v273, 1.0
        %v275 = vsub.f32 %v272, %v266
        %v276 = vmax.f32 %v275, 1.0
        %v277 = vld [vmem:[%s240] sm:$0x1]
        %v278 = vmul.f32 %v277, 0.25
        %v279 = vlaneseq
        %v280 = vshrl.u32 %v279, 7
        %v281 = vadd.s32 %v280, 8
        %v282 = vadd.s32 %v280, 16
        %v283 = vadd.s32 %v280, 24
        %v284 = vadd.s32 %v280, 32
        %v285 = vadd.s32 %v280, 40
        %v286 = vadd.s32 %v280, 48
        %v287 = vadd.s32 %v280, 56
        %v288 = vadd.s32 %v280, 64
        %v289 = vadd.s32 %v280, 72
        %v290 = vadd.s32 %v280, 80
        %v291 = vadd.s32 %v280, 88
        %v292 = vadd.s32 %v280, 96
        %v293 = vadd.s32 %v280, 104
        %v294 = vadd.s32 %v280, 112
        %v295 = vadd.s32 %v280, 120
        %v296 = vadd.s32 %v280, 128
        %v297 = vadd.s32 %v280, 136
        %v298 = vadd.s32 %v280, 144
        %v299 = vadd.s32 %v280, 152
        %v300 = vadd.s32 %v280, 160
        %v301 = vadd.s32 %v280, 168
        %v302 = vadd.s32 %v280, 176
        %v303 = vadd.s32 %v280, 184
        %v304 = vadd.s32 %v280, 192
        %v305 = vadd.s32 %v280, 200
        %v306 = vadd.s32 %v280, 208
        %v307 = vadd.s32 %v280, 216
        %v308 = vadd.s32 %v280, 224
        %v309 = vadd.s32 %v280, 232
        %v310 = vadd.s32 %v280, 240
        %v311 = vadd.s32 %v280, 248
        %v312 = vmul.f32 %v276, 0.5
        %v313 = vmul.f32 %v312, 0.5
        %v314 = vadd.f32 %v266, %v313
        %v315 = vmul.f32 %v274, 0.5
        %v316 = vmul.f32 %v315, 0.5
        %v317 = vadd.f32 %v265, %v316
        %vm318 = vcmp.lt.f32.partialorder %v314, -1.0
        %vm319 = vcmp.gt.f32.partialorder %v314, 16.0
        %vm320 = vmor %vm318, %vm319
        %vm321 = vcmp.lt.f32.partialorder %v317, -1.0
        %vm322 = vmor %vm320, %vm321
        %vm323 = vcmp.gt.f32.partialorder %v317, 16.0
        %vm324 = vmor %vm322, %vm323
        %v325 = vmax.f32 %v314, 0.0
        %v326 = vmax.f32 %v317, 0.0
        %v327 = vcvt.f32.s32.to.zero.pseudo %v325
        %v328 = vcvt.f32.s32.to.zero.pseudo %v326
        %vm329 = vcmp.ge.s32.totalorder %v327, 15
        %vm330 = vcmp.ge.s32.totalorder %v328, 15
        %v331 = vadd.s32 %v327, 1
        %v332 = vsel %vm329, 15, %v331
        %v333 = vadd.s32 %v328, 1
        %v334 = vsel %vm330, 15, %v333
        %v335 = vsel %vm329, 15, %v327
        %v336 = vsel %vm330, 15, %v328
        %v337 = vsel %vm329, 15.0, %v325
        %v338 = vsel %vm330, 15.0, %v326
        %v339 = vcvt.s32.f32 %v335
        %v340 = vsub.f32 %v337, %v339
        %v341 = vcvt.s32.f32 %v336
        %v342 = vsub.f32 %v338, %v341
        %v343 = vsub.f32 1.0, %v340
        %v344 = vsub.f32 1.0, %v342
        %v345 = vsel %vm324, 0.0, %v278
        %v346 = vmul.f32 %v343, %v344
        %v347 = vmul.f32 %v343, %v342
        %v348 = vmul.f32 %v340, %v344
        %v349 = vmul.f32 %v340, %v342
        %v350 = vmul.u32 %v335, 16
        %v351 = vadd.s32 %v350, %v336
        %v352 = vlaneseq
        %v353 = vshrl.u32 %v352, 7
        %v354 = vsub.s32 0, %v353
        %v355 = vrot.slane %v351, %v354
        %vm356 = vcmp.eq.s32.totalorder %v280, %v355
        %vm357 = vcmp.eq.s32.totalorder %v281, %v355
        %vm358 = vcmp.eq.s32.totalorder %v282, %v355
        %vm359 = vcmp.eq.s32.totalorder %v283, %v355
        %vm360 = vcmp.eq.s32.totalorder %v284, %v355
        %vm361 = vcmp.eq.s32.totalorder %v285, %v355
        %vm362 = vcmp.eq.s32.totalorder %v286, %v355
        %vm363 = vcmp.eq.s32.totalorder %v287, %v355
        %vm364 = vcmp.eq.s32.totalorder %v288, %v355
        %vm365 = vcmp.eq.s32.totalorder %v289, %v355
        %vm366 = vcmp.eq.s32.totalorder %v290, %v355
        %vm367 = vcmp.eq.s32.totalorder %v291, %v355
        %vm368 = vcmp.eq.s32.totalorder %v292, %v355
        %vm369 = vcmp.eq.s32.totalorder %v293, %v355
        %vm370 = vcmp.eq.s32.totalorder %v294, %v355
        %vm371 = vcmp.eq.s32.totalorder %v295, %v355
        %vm372 = vcmp.eq.s32.totalorder %v296, %v355
        %vm373 = vcmp.eq.s32.totalorder %v297, %v355
        %vm374 = vcmp.eq.s32.totalorder %v298, %v355
        %vm375 = vcmp.eq.s32.totalorder %v299, %v355
        %vm376 = vcmp.eq.s32.totalorder %v300, %v355
        %vm377 = vcmp.eq.s32.totalorder %v301, %v355
        %vm378 = vcmp.eq.s32.totalorder %v302, %v355
        %vm379 = vcmp.eq.s32.totalorder %v303, %v355
        %vm380 = vcmp.eq.s32.totalorder %v304, %v355
        %vm381 = vcmp.eq.s32.totalorder %v305, %v355
        %vm382 = vcmp.eq.s32.totalorder %v306, %v355
        %vm383 = vcmp.eq.s32.totalorder %v307, %v355
        %vm384 = vcmp.eq.s32.totalorder %v308, %v355
        %vm385 = vcmp.eq.s32.totalorder %v309, %v355
        %vm386 = vcmp.eq.s32.totalorder %v310, %v355
        %vm387 = vcmp.eq.s32.totalorder %v311, %v355
        %v388 = vmul.f32 %v346, %v345
        %v389 = vlaneseq
        %v390 = vshrl.u32 %v389, 7
        %v391 = vsub.s32 0, %v390
        %v392 = vrot.slane %v388, %v391
        %v393 = vsel %vm356, %v392, 0.0
        %v394 = vsel %vm357, %v392, 0.0
        %v395 = vsel %vm358, %v392, 0.0
        %v396 = vsel %vm359, %v392, 0.0
        %v397 = vsel %vm360, %v392, 0.0
        %v398 = vsel %vm361, %v392, 0.0
        %v399 = vsel %vm362, %v392, 0.0
        %v400 = vsel %vm363, %v392, 0.0
        %v401 = vsel %vm364, %v392, 0.0
        %v402 = vsel %vm365, %v392, 0.0
        %v403 = vsel %vm366, %v392, 0.0
        %v404 = vsel %vm367, %v392, 0.0
        %v405 = vsel %vm368, %v392, 0.0
        %v406 = vsel %vm369, %v392, 0.0
        %v407 = vsel %vm370, %v392, 0.0
        %v408 = vsel %vm371, %v392, 0.0
        %v409 = vsel %vm372, %v392, 0.0
        %v410 = vsel %vm373, %v392, 0.0
        %v411 = vsel %vm374, %v392, 0.0
        %v412 = vsel %vm375, %v392, 0.0
        %v413 = vsel %vm376, %v392, 0.0
        %v414 = vsel %vm377, %v392, 0.0
        %v415 = vsel %vm378, %v392, 0.0
        %v416 = vsel %vm379, %v392, 0.0
        %v417 = vsel %vm380, %v392, 0.0
        %v418 = vsel %vm381, %v392, 0.0
        %v419 = vsel %vm382, %v392, 0.0
        %v420 = vsel %vm383, %v392, 0.0
        %v421 = vsel %vm384, %v392, 0.0
        %v422 = vsel %vm385, %v392, 0.0
        %v423 = vsel %vm386, %v392, 0.0
        %v424 = vsel %vm387, %v392, 0.0
        %v425 = vadd.f32 %v393, 0.0
        %v426 = vadd.f32 %v394, 0.0
        %v427 = vadd.f32 %v395, 0.0
        %v428 = vadd.f32 %v396, 0.0
        %v429 = vadd.f32 %v397, 0.0
        %v430 = vadd.f32 %v398, 0.0
        %v431 = vadd.f32 %v399, 0.0
        %v432 = vadd.f32 %v400, 0.0
        %v433 = vadd.f32 %v401, 0.0
        %v434 = vadd.f32 %v402, 0.0
        %v435 = vadd.f32 %v403, 0.0
        %v436 = vadd.f32 %v404, 0.0
        %v437 = vadd.f32 %v405, 0.0
        %v438 = vadd.f32 %v406, 0.0
        %v439 = vadd.f32 %v407, 0.0
        %v440 = vadd.f32 %v408, 0.0
        %v441 = vadd.f32 %v409, 0.0
        %v442 = vadd.f32 %v410, 0.0
        %v443 = vadd.f32 %v411, 0.0
        %v444 = vadd.f32 %v412, 0.0
        %v445 = vadd.f32 %v413, 0.0
        %v446 = vadd.f32 %v414, 0.0
        %v447 = vadd.f32 %v415, 0.0
        %v448 = vadd.f32 %v416, 0.0
        %v449 = vadd.f32 %v417, 0.0
        %v450 = vadd.f32 %v418, 0.0
        %v451 = vadd.f32 %v419, 0.0
        %v452 = vadd.f32 %v420, 0.0
        %v453 = vadd.f32 %v421, 0.0
        %v454 = vadd.f32 %v422, 0.0
        %v455 = vadd.f32 %v423, 0.0
        %v456 = vadd.f32 %v424, 0.0
        %v457 = vadd.s32 %v350, %v334
        %v458 = vlaneseq
        %v459 = vshrl.u32 %v458, 7
        %v460 = vsub.s32 0, %v459
        %v461 = vrot.slane %v457, %v460
        %vm462 = vcmp.eq.s32.totalorder %v280, %v461
        %vm463 = vcmp.eq.s32.totalorder %v281, %v461
        %vm464 = vcmp.eq.s32.totalorder %v282, %v461
        %vm465 = vcmp.eq.s32.totalorder %v283, %v461
        %vm466 = vcmp.eq.s32.totalorder %v284, %v461
        %vm467 = vcmp.eq.s32.totalorder %v285, %v461
        %vm468 = vcmp.eq.s32.totalorder %v286, %v461
        %vm469 = vcmp.eq.s32.totalorder %v287, %v461
        %vm470 = vcmp.eq.s32.totalorder %v288, %v461
        %vm471 = vcmp.eq.s32.totalorder %v289, %v461
        %vm472 = vcmp.eq.s32.totalorder %v290, %v461
        %vm473 = vcmp.eq.s32.totalorder %v291, %v461
        %vm474 = vcmp.eq.s32.totalorder %v292, %v461
        %vm475 = vcmp.eq.s32.totalorder %v293, %v461
        %vm476 = vcmp.eq.s32.totalorder %v294, %v461
        %vm477 = vcmp.eq.s32.totalorder %v295, %v461
        %vm478 = vcmp.eq.s32.totalorder %v296, %v461
        %vm479 = vcmp.eq.s32.totalorder %v297, %v461
        %vm480 = vcmp.eq.s32.totalorder %v298, %v461
        %vm481 = vcmp.eq.s32.totalorder %v299, %v461
        %vm482 = vcmp.eq.s32.totalorder %v300, %v461
        %vm483 = vcmp.eq.s32.totalorder %v301, %v461
        %vm484 = vcmp.eq.s32.totalorder %v302, %v461
        %vm485 = vcmp.eq.s32.totalorder %v303, %v461
        %vm486 = vcmp.eq.s32.totalorder %v304, %v461
        %vm487 = vcmp.eq.s32.totalorder %v305, %v461
        %vm488 = vcmp.eq.s32.totalorder %v306, %v461
        %vm489 = vcmp.eq.s32.totalorder %v307, %v461
        %vm490 = vcmp.eq.s32.totalorder %v308, %v461
        %vm491 = vcmp.eq.s32.totalorder %v309, %v461
        %vm492 = vcmp.eq.s32.totalorder %v310, %v461
        %vm493 = vcmp.eq.s32.totalorder %v311, %v461
        %v494 = vmul.f32 %v347, %v345
        %v495 = vlaneseq
        %v496 = vshrl.u32 %v495, 7
        %v497 = vsub.s32 0, %v496
        %v498 = vrot.slane %v494, %v497
        %v499 = vsel %vm462, %v498, 0.0
        %v500 = vsel %vm463, %v498, 0.0
        %v501 = vsel %vm464, %v498, 0.0
        %v502 = vsel %vm465, %v498, 0.0
        %v503 = vsel %vm466, %v498, 0.0
        %v504 = vsel %vm467, %v498, 0.0
        %v505 = vsel %vm468, %v498, 0.0
        %v506 = vsel %vm469, %v498, 0.0
        %v507 = vsel %vm470, %v498, 0.0
        %v508 = vsel %vm471, %v498, 0.0
        %v509 = vsel %vm472, %v498, 0.0
        %v510 = vsel %vm473, %v498, 0.0
        %v511 = vsel %vm474, %v498, 0.0
        %v512 = vsel %vm475, %v498, 0.0
        %v513 = vsel %vm476, %v498, 0.0
        %v514 = vsel %vm477, %v498, 0.0
        %v515 = vsel %vm478, %v498, 0.0
        %v516 = vsel %vm479, %v498, 0.0
        %v517 = vsel %vm480, %v498, 0.0
        %v518 = vsel %vm481, %v498, 0.0
        %v519 = vsel %vm482, %v498, 0.0
        %v520 = vsel %vm483, %v498, 0.0
        %v521 = vsel %vm484, %v498, 0.0
        %v522 = vsel %vm485, %v498, 0.0
        %v523 = vsel %vm486, %v498, 0.0
        %v524 = vsel %vm487, %v498, 0.0
        %v525 = vsel %vm488, %v498, 0.0
        %v526 = vsel %vm489, %v498, 0.0
        %v527 = vsel %vm490, %v498, 0.0
        %v528 = vsel %vm491, %v498, 0.0
        %v529 = vsel %vm492, %v498, 0.0
        %v530 = vsel %vm493, %v498, 0.0
        %v531 = vadd.f32 %v425, %v499
        %v532 = vadd.f32 %v426, %v500
        %v533 = vadd.f32 %v427, %v501
        %v534 = vadd.f32 %v428, %v502
        %v535 = vadd.f32 %v429, %v503
        %v536 = vadd.f32 %v430, %v504
        %v537 = vadd.f32 %v431, %v505
        %v538 = vadd.f32 %v432, %v506
        %v539 = vadd.f32 %v433, %v507
        %v540 = vadd.f32 %v434, %v508
        %v541 = vadd.f32 %v435, %v509
        %v542 = vadd.f32 %v436, %v510
        %v543 = vadd.f32 %v437, %v511
        %v544 = vadd.f32 %v438, %v512
        %v545 = vadd.f32 %v439, %v513
        %v546 = vadd.f32 %v440, %v514
        %v547 = vadd.f32 %v441, %v515
        %v548 = vadd.f32 %v442, %v516
        %v549 = vadd.f32 %v443, %v517
        %v550 = vadd.f32 %v444, %v518
        %v551 = vadd.f32 %v445, %v519
        %v552 = vadd.f32 %v446, %v520
        %v553 = vadd.f32 %v447, %v521
        %v554 = vadd.f32 %v448, %v522
        %v555 = vadd.f32 %v449, %v523
        %v556 = vadd.f32 %v450, %v524
        %v557 = vadd.f32 %v451, %v525
        %v558 = vadd.f32 %v452, %v526
        %v559 = vadd.f32 %v453, %v527
        %v560 = vadd.f32 %v454, %v528
        %v561 = vadd.f32 %v455, %v529
        %v562 = vadd.f32 %v456, %v530
        %v563 = vmul.u32 %v332, 16
        %v564 = vadd.s32 %v563, %v336
        %v565 = vlaneseq
        %v566 = vshrl.u32 %v565, 7
        %v567 = vsub.s32 0, %v566
        %v568 = vrot.slane %v564, %v567
        %vm569 = vcmp.eq.s32.totalorder %v280, %v568
        %vm570 = vcmp.eq.s32.totalorder %v281, %v568
        %vm571 = vcmp.eq.s32.totalorder %v282, %v568
        %vm572 = vcmp.eq.s32.totalorder %v283, %v568
        %vm573 = vcmp.eq.s32.totalorder %v284, %v568
        %vm574 = vcmp.eq.s32.totalorder %v285, %v568
        %vm575 = vcmp.eq.s32.totalorder %v286, %v568
        %vm576 = vcmp.eq.s32.totalorder %v287, %v568
        %vm577 = vcmp.eq.s32.totalorder %v288, %v568
        %vm578 = vcmp.eq.s32.totalorder %v289, %v568
        %vm579 = vcmp.eq.s32.totalorder %v290, %v568
        %vm580 = vcmp.eq.s32.totalorder %v291, %v568
        %vm581 = vcmp.eq.s32.totalorder %v292, %v568
        %vm582 = vcmp.eq.s32.totalorder %v293, %v568
        %vm583 = vcmp.eq.s32.totalorder %v294, %v568
        %vm584 = vcmp.eq.s32.totalorder %v295, %v568
        %vm585 = vcmp.eq.s32.totalorder %v296, %v568
        %vm586 = vcmp.eq.s32.totalorder %v297, %v568
        %vm587 = vcmp.eq.s32.totalorder %v298, %v568
        %vm588 = vcmp.eq.s32.totalorder %v299, %v568
        %vm589 = vcmp.eq.s32.totalorder %v300, %v568
        %vm590 = vcmp.eq.s32.totalorder %v301, %v568
        %vm591 = vcmp.eq.s32.totalorder %v302, %v568
        %vm592 = vcmp.eq.s32.totalorder %v303, %v568
        %vm593 = vcmp.eq.s32.totalorder %v304, %v568
        %vm594 = vcmp.eq.s32.totalorder %v305, %v568
        %vm595 = vcmp.eq.s32.totalorder %v306, %v568
        %vm596 = vcmp.eq.s32.totalorder %v307, %v568
        %vm597 = vcmp.eq.s32.totalorder %v308, %v568
        %vm598 = vcmp.eq.s32.totalorder %v309, %v568
        %vm599 = vcmp.eq.s32.totalorder %v310, %v568
        %vm600 = vcmp.eq.s32.totalorder %v311, %v568
        %v601 = vmul.f32 %v348, %v345
        %v602 = vlaneseq
        %v603 = vshrl.u32 %v602, 7
        %v604 = vsub.s32 0, %v603
        %v605 = vrot.slane %v601, %v604
        %v606 = vsel %vm569, %v605, 0.0
        %v607 = vsel %vm570, %v605, 0.0
        %v608 = vsel %vm571, %v605, 0.0
        %v609 = vsel %vm572, %v605, 0.0
        %v610 = vsel %vm573, %v605, 0.0
        %v611 = vsel %vm574, %v605, 0.0
        %v612 = vsel %vm575, %v605, 0.0
        %v613 = vsel %vm576, %v605, 0.0
        %v614 = vsel %vm577, %v605, 0.0
        %v615 = vsel %vm578, %v605, 0.0
        %v616 = vsel %vm579, %v605, 0.0
        %v617 = vsel %vm580, %v605, 0.0
        %v618 = vsel %vm581, %v605, 0.0
        %v619 = vsel %vm582, %v605, 0.0
        %v620 = vsel %vm583, %v605, 0.0
        %v621 = vsel %vm584, %v605, 0.0
        %v622 = vsel %vm585, %v605, 0.0
        %v623 = vsel %vm586, %v605, 0.0
        %v624 = vsel %vm587, %v605, 0.0
        %v625 = vsel %vm588, %v605, 0.0
        %v626 = vsel %vm589, %v605, 0.0
        %v627 = vsel %vm590, %v605, 0.0
        %v628 = vsel %vm591, %v605, 0.0
        %v629 = vsel %vm592, %v605, 0.0
        %v630 = vsel %vm593, %v605, 0.0
        %v631 = vsel %vm594, %v605, 0.0
        %v632 = vsel %vm595, %v605, 0.0
        %v633 = vsel %vm596, %v605, 0.0
        %v634 = vsel %vm597, %v605, 0.0
        %v635 = vsel %vm598, %v605, 0.0
        %v636 = vsel %vm599, %v605, 0.0
        %v637 = vsel %vm600, %v605, 0.0
        %v638 = vadd.f32 %v531, %v606
        %v639 = vadd.f32 %v532, %v607
        %v640 = vadd.f32 %v533, %v608
        %v641 = vadd.f32 %v534, %v609
        %v642 = vadd.f32 %v535, %v610
        %v643 = vadd.f32 %v536, %v611
        %v644 = vadd.f32 %v537, %v612
        %v645 = vadd.f32 %v538, %v613
        %v646 = vadd.f32 %v539, %v614
        %v647 = vadd.f32 %v540, %v615
        %v648 = vadd.f32 %v541, %v616
        %v649 = vadd.f32 %v542, %v617
        %v650 = vadd.f32 %v543, %v618
        %v651 = vadd.f32 %v544, %v619
        %v652 = vadd.f32 %v545, %v620
        %v653 = vadd.f32 %v546, %v621
        %v654 = vadd.f32 %v547, %v622
        %v655 = vadd.f32 %v548, %v623
        %v656 = vadd.f32 %v549, %v624
        %v657 = vadd.f32 %v550, %v625
        %v658 = vadd.f32 %v551, %v626
        %v659 = vadd.f32 %v552, %v627
        %v660 = vadd.f32 %v553, %v628
        %v661 = vadd.f32 %v554, %v629
        %v662 = vadd.f32 %v555, %v630
        %v663 = vadd.f32 %v556, %v631
        %v664 = vadd.f32 %v557, %v632
        %v665 = vadd.f32 %v558, %v633
        %v666 = vadd.f32 %v559, %v634
        %v667 = vadd.f32 %v560, %v635
        %v668 = vadd.f32 %v561, %v636
        %v669 = vadd.f32 %v562, %v637
        %v670 = vadd.s32 %v563, %v334
        %v671 = vlaneseq
        %v672 = vshrl.u32 %v671, 7
        %v673 = vsub.s32 0, %v672
        %v674 = vrot.slane %v670, %v673
        %vm675 = vcmp.eq.s32.totalorder %v280, %v674
        %vm676 = vcmp.eq.s32.totalorder %v281, %v674
        %vm677 = vcmp.eq.s32.totalorder %v282, %v674
        %vm678 = vcmp.eq.s32.totalorder %v283, %v674
        %vm679 = vcmp.eq.s32.totalorder %v284, %v674
        %vm680 = vcmp.eq.s32.totalorder %v285, %v674
        %vm681 = vcmp.eq.s32.totalorder %v286, %v674
        %vm682 = vcmp.eq.s32.totalorder %v287, %v674
        %vm683 = vcmp.eq.s32.totalorder %v288, %v674
        %vm684 = vcmp.eq.s32.totalorder %v289, %v674
        %vm685 = vcmp.eq.s32.totalorder %v290, %v674
        %vm686 = vcmp.eq.s32.totalorder %v291, %v674
        %vm687 = vcmp.eq.s32.totalorder %v292, %v674
        %vm688 = vcmp.eq.s32.totalorder %v293, %v674
        %vm689 = vcmp.eq.s32.totalorder %v294, %v674
        %vm690 = vcmp.eq.s32.totalorder %v295, %v674
        %vm691 = vcmp.eq.s32.totalorder %v296, %v674
        %vm692 = vcmp.eq.s32.totalorder %v297, %v674
        %vm693 = vcmp.eq.s32.totalorder %v298, %v674
        %vm694 = vcmp.eq.s32.totalorder %v299, %v674
        %vm695 = vcmp.eq.s32.totalorder %v300, %v674
        %vm696 = vcmp.eq.s32.totalorder %v301, %v674
        %vm697 = vcmp.eq.s32.totalorder %v302, %v674
        %vm698 = vcmp.eq.s32.totalorder %v303, %v674
        %vm699 = vcmp.eq.s32.totalorder %v304, %v674
        %vm700 = vcmp.eq.s32.totalorder %v305, %v674
        %vm701 = vcmp.eq.s32.totalorder %v306, %v674
        %vm702 = vcmp.eq.s32.totalorder %v307, %v674
        %vm703 = vcmp.eq.s32.totalorder %v308, %v674
        %vm704 = vcmp.eq.s32.totalorder %v309, %v674
        %vm705 = vcmp.eq.s32.totalorder %v310, %v674
        %vm706 = vcmp.eq.s32.totalorder %v311, %v674
        %v707 = vmul.f32 %v349, %v345
        %v708 = vlaneseq
        %v709 = vshrl.u32 %v708, 7
        %v710 = vsub.s32 0, %v709
        %v711 = vrot.slane %v707, %v710
        %v712 = vsel %vm675, %v711, 0.0
        %v713 = vsel %vm676, %v711, 0.0
        %v714 = vsel %vm677, %v711, 0.0
        %v715 = vsel %vm678, %v711, 0.0
        %v716 = vsel %vm679, %v711, 0.0
        %v717 = vsel %vm680, %v711, 0.0
        %v718 = vsel %vm681, %v711, 0.0
        %v719 = vsel %vm682, %v711, 0.0
        %v720 = vsel %vm683, %v711, 0.0
        %v721 = vsel %vm684, %v711, 0.0
        %v722 = vsel %vm685, %v711, 0.0
        %v723 = vsel %vm686, %v711, 0.0
        %v724 = vsel %vm687, %v711, 0.0
        %v725 = vsel %vm688, %v711, 0.0
        %v726 = vsel %vm689, %v711, 0.0
        %v727 = vsel %vm690, %v711, 0.0
        %v728 = vsel %vm691, %v711, 0.0
        %v729 = vsel %vm692, %v711, 0.0
        %v730 = vsel %vm693, %v711, 0.0
        %v731 = vsel %vm694, %v711, 0.0
        %v732 = vsel %vm695, %v711, 0.0
        %v733 = vsel %vm696, %v711, 0.0
        %v734 = vsel %vm697, %v711, 0.0
        %v735 = vsel %vm698, %v711, 0.0
        %v736 = vsel %vm699, %v711, 0.0
        %v737 = vsel %vm700, %v711, 0.0
        %v738 = vsel %vm701, %v711, 0.0
        %v739 = vsel %vm702, %v711, 0.0
        %v740 = vsel %vm703, %v711, 0.0
        %v741 = vsel %vm704, %v711, 0.0
        %v742 = vsel %vm705, %v711, 0.0
        %v743 = vsel %vm706, %v711, 0.0
        %v744 = vadd.f32 %v638, %v712
        %v745 = vadd.f32 %v639, %v713
        %v746 = vadd.f32 %v640, %v714
        %v747 = vadd.f32 %v641, %v715
        %v748 = vadd.f32 %v642, %v716
        %v749 = vadd.f32 %v643, %v717
        %v750 = vadd.f32 %v644, %v718
        %v751 = vadd.f32 %v645, %v719
        %v752 = vadd.f32 %v646, %v720
        %v753 = vadd.f32 %v647, %v721
        %v754 = vadd.f32 %v648, %v722
        %v755 = vadd.f32 %v649, %v723
        %v756 = vadd.f32 %v650, %v724
        %v757 = vadd.f32 %v651, %v725
        %v758 = vadd.f32 %v652, %v726
        %v759 = vadd.f32 %v653, %v727
        %v760 = vadd.f32 %v654, %v728
        %v761 = vadd.f32 %v655, %v729
        %v762 = vadd.f32 %v656, %v730
        %v763 = vadd.f32 %v657, %v731
        %v764 = vadd.f32 %v658, %v732
        %v765 = vadd.f32 %v659, %v733
        %v766 = vadd.f32 %v660, %v734
        %v767 = vadd.f32 %v661, %v735
        %v768 = vadd.f32 %v662, %v736
        %v769 = vadd.f32 %v663, %v737
        %v770 = vadd.f32 %v664, %v738
        %v771 = vadd.f32 %v665, %v739
        %v772 = vadd.f32 %v666, %v740
        %v773 = vadd.f32 %v667, %v741
        %v774 = vadd.f32 %v668, %v742
        %v775 = vadd.f32 %v669, %v743
        %v776 = vmul.f32 %v274, 1.5
        %v777 = vmul.f32 %v776, 0.5
        %v778 = vadd.f32 %v265, %v777
        %vm779 = vcmp.lt.f32.partialorder %v778, -1.0
        %vm780 = vmor %vm320, %vm779
        %vm781 = vcmp.gt.f32.partialorder %v778, 16.0
        %vm782 = vmor %vm780, %vm781
        %v783 = vmax.f32 %v778, 0.0
        %v784 = vcvt.f32.s32.to.zero.pseudo %v783
        %vm785 = vcmp.ge.s32.totalorder %v784, 15
        %v786 = vadd.s32 %v784, 1
        %v787 = vsel %vm785, 15, %v786
        %v788 = vsel %vm785, 15, %v784
        %v789 = vsel %vm785, 15.0, %v783
        %v790 = vcvt.s32.f32 %v788
        %v791 = vsub.f32 %v789, %v790
        %v792 = vsub.f32 1.0, %v791
        %v793 = vsel %vm782, 0.0, %v278
        %v794 = vmul.f32 %v343, %v792
        %v795 = vmul.f32 %v343, %v791
        %v796 = vmul.f32 %v340, %v792
        %v797 = vmul.f32 %v340, %v791
        %v798 = vadd.s32 %v350, %v788
        %v799 = vlaneseq
        %v800 = vshrl.u32 %v799, 7
        %v801 = vsub.s32 0, %v800
        %v802 = vrot.slane %v798, %v801
        %vm803 = vcmp.eq.s32.totalorder %v280, %v802
        %vm804 = vcmp.eq.s32.totalorder %v281, %v802
        %vm805 = vcmp.eq.s32.totalorder %v282, %v802
        %vm806 = vcmp.eq.s32.totalorder %v283, %v802
        %vm807 = vcmp.eq.s32.totalorder %v284, %v802
        %vm808 = vcmp.eq.s32.totalorder %v285, %v802
        %vm809 = vcmp.eq.s32.totalorder %v286, %v802
        %vm810 = vcmp.eq.s32.totalorder %v287, %v802
        %vm811 = vcmp.eq.s32.totalorder %v288, %v802
        %vm812 = vcmp.eq.s32.totalorder %v289, %v802
        %vm813 = vcmp.eq.s32.totalorder %v290, %v802
        %vm814 = vcmp.eq.s32.totalorder %v291, %v802
        %vm815 = vcmp.eq.s32.totalorder %v292, %v802
        %vm816 = vcmp.eq.s32.totalorder %v293, %v802
        %vm817 = vcmp.eq.s32.totalorder %v294, %v802
        %vm818 = vcmp.eq.s32.totalorder %v295, %v802
        %vm819 = vcmp.eq.s32.totalorder %v296, %v802
        %vm820 = vcmp.eq.s32.totalorder %v297, %v802
        %vm821 = vcmp.eq.s32.totalorder %v298, %v802
        %vm822 = vcmp.eq.s32.totalorder %v299, %v802
        %vm823 = vcmp.eq.s32.totalorder %v300, %v802
        %vm824 = vcmp.eq.s32.totalorder %v301, %v802
        %vm825 = vcmp.eq.s32.totalorder %v302, %v802
        %vm826 = vcmp.eq.s32.totalorder %v303, %v802
        %vm827 = vcmp.eq.s32.totalorder %v304, %v802
        %vm828 = vcmp.eq.s32.totalorder %v305, %v802
        %vm829 = vcmp.eq.s32.totalorder %v306, %v802
        %vm830 = vcmp.eq.s32.totalorder %v307, %v802
        %vm831 = vcmp.eq.s32.totalorder %v308, %v802
        %vm832 = vcmp.eq.s32.totalorder %v309, %v802
        %vm833 = vcmp.eq.s32.totalorder %v310, %v802
        %vm834 = vcmp.eq.s32.totalorder %v311, %v802
        %v835 = vmul.f32 %v794, %v793
        %v836 = vlaneseq
        %v837 = vshrl.u32 %v836, 7
        %v838 = vsub.s32 0, %v837
        %v839 = vrot.slane %v835, %v838
        %v840 = vsel %vm803, %v839, 0.0
        %v841 = vsel %vm804, %v839, 0.0
        %v842 = vsel %vm805, %v839, 0.0
        %v843 = vsel %vm806, %v839, 0.0
        %v844 = vsel %vm807, %v839, 0.0
        %v845 = vsel %vm808, %v839, 0.0
        %v846 = vsel %vm809, %v839, 0.0
        %v847 = vsel %vm810, %v839, 0.0
        %v848 = vsel %vm811, %v839, 0.0
        %v849 = vsel %vm812, %v839, 0.0
        %v850 = vsel %vm813, %v839, 0.0
        %v851 = vsel %vm814, %v839, 0.0
        %v852 = vsel %vm815, %v839, 0.0
        %v853 = vsel %vm816, %v839, 0.0
        %v854 = vsel %vm817, %v839, 0.0
        %v855 = vsel %vm818, %v839, 0.0
        %v856 = vsel %vm819, %v839, 0.0
        %v857 = vsel %vm820, %v839, 0.0
        %v858 = vsel %vm821, %v839, 0.0
        %v859 = vsel %vm822, %v839, 0.0
        %v860 = vsel %vm823, %v839, 0.0
        %v861 = vsel %vm824, %v839, 0.0
        %v862 = vsel %vm825, %v839, 0.0
        %v863 = vsel %vm826, %v839, 0.0
        %v864 = vsel %vm827, %v839, 0.0
        %v865 = vsel %vm828, %v839, 0.0
        %v866 = vsel %vm829, %v839, 0.0
        %v867 = vsel %vm830, %v839, 0.0
        %v868 = vsel %vm831, %v839, 0.0
        %v869 = vsel %vm832, %v839, 0.0
        %v870 = vsel %vm833, %v839, 0.0
        %v871 = vsel %vm834, %v839, 0.0
        %v872 = vadd.f32 %v744, %v840
        %v873 = vadd.f32 %v745, %v841
        %v874 = vadd.f32 %v746, %v842
        %v875 = vadd.f32 %v747, %v843
        %v876 = vadd.f32 %v748, %v844
        %v877 = vadd.f32 %v749, %v845
        %v878 = vadd.f32 %v750, %v846
        %v879 = vadd.f32 %v751, %v847
        %v880 = vadd.f32 %v752, %v848
        %v881 = vadd.f32 %v753, %v849
        %v882 = vadd.f32 %v754, %v850
        %v883 = vadd.f32 %v755, %v851
        %v884 = vadd.f32 %v756, %v852
        %v885 = vadd.f32 %v757, %v853
        %v886 = vadd.f32 %v758, %v854
        %v887 = vadd.f32 %v759, %v855
        %v888 = vadd.f32 %v760, %v856
        %v889 = vadd.f32 %v761, %v857
        %v890 = vadd.f32 %v762, %v858
        %v891 = vadd.f32 %v763, %v859
        %v892 = vadd.f32 %v764, %v860
        %v893 = vadd.f32 %v765, %v861
        %v894 = vadd.f32 %v766, %v862
        %v895 = vadd.f32 %v767, %v863
        %v896 = vadd.f32 %v768, %v864
        %v897 = vadd.f32 %v769, %v865
        %v898 = vadd.f32 %v770, %v866
        %v899 = vadd.f32 %v771, %v867
        %v900 = vadd.f32 %v772, %v868
        %v901 = vadd.f32 %v773, %v869
        %v902 = vadd.f32 %v774, %v870
        %v903 = vadd.f32 %v775, %v871
        %v904 = vadd.s32 %v350, %v787
        %v905 = vlaneseq
        %v906 = vshrl.u32 %v905, 7
        %v907 = vsub.s32 0, %v906
        %v908 = vrot.slane %v904, %v907
        %vm909 = vcmp.eq.s32.totalorder %v280, %v908
        %vm910 = vcmp.eq.s32.totalorder %v281, %v908
        %vm911 = vcmp.eq.s32.totalorder %v282, %v908
        %vm912 = vcmp.eq.s32.totalorder %v283, %v908
        %vm913 = vcmp.eq.s32.totalorder %v284, %v908
        %vm914 = vcmp.eq.s32.totalorder %v285, %v908
        %vm915 = vcmp.eq.s32.totalorder %v286, %v908
        %vm916 = vcmp.eq.s32.totalorder %v287, %v908
        %vm917 = vcmp.eq.s32.totalorder %v288, %v908
        %vm918 = vcmp.eq.s32.totalorder %v289, %v908
        %vm919 = vcmp.eq.s32.totalorder %v290, %v908
        %vm920 = vcmp.eq.s32.totalorder %v291, %v908
        %vm921 = vcmp.eq.s32.totalorder %v292, %v908
        %vm922 = vcmp.eq.s32.totalorder %v293, %v908
        %vm923 = vcmp.eq.s32.totalorder %v294, %v908
        %vm924 = vcmp.eq.s32.totalorder %v295, %v908
        %vm925 = vcmp.eq.s32.totalorder %v296, %v908
        %vm926 = vcmp.eq.s32.totalorder %v297, %v908
        %vm927 = vcmp.eq.s32.totalorder %v298, %v908
        %vm928 = vcmp.eq.s32.totalorder %v299, %v908
        %vm929 = vcmp.eq.s32.totalorder %v300, %v908
        %vm930 = vcmp.eq.s32.totalorder %v301, %v908
        %vm931 = vcmp.eq.s32.totalorder %v302, %v908
        %vm932 = vcmp.eq.s32.totalorder %v303, %v908
        %vm933 = vcmp.eq.s32.totalorder %v304, %v908
        %vm934 = vcmp.eq.s32.totalorder %v305, %v908
        %vm935 = vcmp.eq.s32.totalorder %v306, %v908
        %vm936 = vcmp.eq.s32.totalorder %v307, %v908
        %vm937 = vcmp.eq.s32.totalorder %v308, %v908
        %vm938 = vcmp.eq.s32.totalorder %v309, %v908
        %vm939 = vcmp.eq.s32.totalorder %v310, %v908
        %vm940 = vcmp.eq.s32.totalorder %v311, %v908
        %v941 = vmul.f32 %v795, %v793
        %v942 = vlaneseq
        %v943 = vshrl.u32 %v942, 7
        %v944 = vsub.s32 0, %v943
        %v945 = vrot.slane %v941, %v944
        %v946 = vsel %vm909, %v945, 0.0
        %v947 = vsel %vm910, %v945, 0.0
        %v948 = vsel %vm911, %v945, 0.0
        %v949 = vsel %vm912, %v945, 0.0
        %v950 = vsel %vm913, %v945, 0.0
        %v951 = vsel %vm914, %v945, 0.0
        %v952 = vsel %vm915, %v945, 0.0
        %v953 = vsel %vm916, %v945, 0.0
        %v954 = vsel %vm917, %v945, 0.0
        %v955 = vsel %vm918, %v945, 0.0
        %v956 = vsel %vm919, %v945, 0.0
        %v957 = vsel %vm920, %v945, 0.0
        %v958 = vsel %vm921, %v945, 0.0
        %v959 = vsel %vm922, %v945, 0.0
        %v960 = vsel %vm923, %v945, 0.0
        %v961 = vsel %vm924, %v945, 0.0
        %v962 = vsel %vm925, %v945, 0.0
        %v963 = vsel %vm926, %v945, 0.0
        %v964 = vsel %vm927, %v945, 0.0
        %v965 = vsel %vm928, %v945, 0.0
        %v966 = vsel %vm929, %v945, 0.0
        %v967 = vsel %vm930, %v945, 0.0
        %v968 = vsel %vm931, %v945, 0.0
        %v969 = vsel %vm932, %v945, 0.0
        %v970 = vsel %vm933, %v945, 0.0
        %v971 = vsel %vm934, %v945, 0.0
        %v972 = vsel %vm935, %v945, 0.0
        %v973 = vsel %vm936, %v945, 0.0
        %v974 = vsel %vm937, %v945, 0.0
        %v975 = vsel %vm938, %v945, 0.0
        %v976 = vsel %vm939, %v945, 0.0
        %v977 = vsel %vm940, %v945, 0.0
        %v978 = vadd.f32 %v872, %v946
        %v979 = vadd.f32 %v873, %v947
        %v980 = vadd.f32 %v874, %v948
        %v981 = vadd.f32 %v875, %v949
        %v982 = vadd.f32 %v876, %v950
        %v983 = vadd.f32 %v877, %v951
        %v984 = vadd.f32 %v878, %v952
        %v985 = vadd.f32 %v879, %v953
        %v986 = vadd.f32 %v880, %v954
        %v987 = vadd.f32 %v881, %v955
        %v988 = vadd.f32 %v882, %v956
        %v989 = vadd.f32 %v883, %v957
        %v990 = vadd.f32 %v884, %v958
        %v991 = vadd.f32 %v885, %v959
        %v992 = vadd.f32 %v886, %v960
        %v993 = vadd.f32 %v887, %v961
        %v994 = vadd.f32 %v888, %v962
        %v995 = vadd.f32 %v889, %v963
        %v996 = vadd.f32 %v890, %v964
        %v997 = vadd.f32 %v891, %v965
        %v998 = vadd.f32 %v892, %v966
        %v999 = vadd.f32 %v893, %v967
        %v1000 = vadd.f32 %v894, %v968
        %v1001 = vadd.f32 %v895, %v969
        %v1002 = vadd.f32 %v896, %v970
        %v1003 = vadd.f32 %v897, %v971
        %v1004 = vadd.f32 %v898, %v972
        %v1005 = vadd.f32 %v899, %v973
        %v1006 = vadd.f32 %v900, %v974
        %v1007 = vadd.f32 %v901, %v975
        %v1008 = vadd.f32 %v902, %v976
        %v1009 = vadd.f32 %v903, %v977
        %v1010 = vadd.s32 %v563, %v788
        %v1011 = vlaneseq
        %v1012 = vshrl.u32 %v1011, 7
        %v1013 = vsub.s32 0, %v1012
        %v1014 = vrot.slane %v1010, %v1013
        %vm1015 = vcmp.eq.s32.totalorder %v280, %v1014
        %vm1016 = vcmp.eq.s32.totalorder %v281, %v1014
        %vm1017 = vcmp.eq.s32.totalorder %v282, %v1014
        %vm1018 = vcmp.eq.s32.totalorder %v283, %v1014
        %vm1019 = vcmp.eq.s32.totalorder %v284, %v1014
        %vm1020 = vcmp.eq.s32.totalorder %v285, %v1014
        %vm1021 = vcmp.eq.s32.totalorder %v286, %v1014
        %vm1022 = vcmp.eq.s32.totalorder %v287, %v1014
        %vm1023 = vcmp.eq.s32.totalorder %v288, %v1014
        %vm1024 = vcmp.eq.s32.totalorder %v289, %v1014
        %vm1025 = vcmp.eq.s32.totalorder %v290, %v1014
        %vm1026 = vcmp.eq.s32.totalorder %v291, %v1014
        %vm1027 = vcmp.eq.s32.totalorder %v292, %v1014
        %vm1028 = vcmp.eq.s32.totalorder %v293, %v1014
        %vm1029 = vcmp.eq.s32.totalorder %v294, %v1014
        %vm1030 = vcmp.eq.s32.totalorder %v295, %v1014
        %vm1031 = vcmp.eq.s32.totalorder %v296, %v1014
        %vm1032 = vcmp.eq.s32.totalorder %v297, %v1014
        %vm1033 = vcmp.eq.s32.totalorder %v298, %v1014
        %vm1034 = vcmp.eq.s32.totalorder %v299, %v1014
        %vm1035 = vcmp.eq.s32.totalorder %v300, %v1014
        %vm1036 = vcmp.eq.s32.totalorder %v301, %v1014
        %vm1037 = vcmp.eq.s32.totalorder %v302, %v1014
        %vm1038 = vcmp.eq.s32.totalorder %v303, %v1014
        %vm1039 = vcmp.eq.s32.totalorder %v304, %v1014
        %vm1040 = vcmp.eq.s32.totalorder %v305, %v1014
        %vm1041 = vcmp.eq.s32.totalorder %v306, %v1014
        %vm1042 = vcmp.eq.s32.totalorder %v307, %v1014
        %vm1043 = vcmp.eq.s32.totalorder %v308, %v1014
        %vm1044 = vcmp.eq.s32.totalorder %v309, %v1014
        %vm1045 = vcmp.eq.s32.totalorder %v310, %v1014
        %vm1046 = vcmp.eq.s32.totalorder %v311, %v1014
        %v1047 = vmul.f32 %v796, %v793
        %v1048 = vlaneseq
        %v1049 = vshrl.u32 %v1048, 7
        %v1050 = vsub.s32 0, %v1049
        %v1051 = vrot.slane %v1047, %v1050
        %v1052 = vsel %vm1015, %v1051, 0.0
        %v1053 = vsel %vm1016, %v1051, 0.0
        %v1054 = vsel %vm1017, %v1051, 0.0
        %v1055 = vsel %vm1018, %v1051, 0.0
        %v1056 = vsel %vm1019, %v1051, 0.0
        %v1057 = vsel %vm1020, %v1051, 0.0
        %v1058 = vsel %vm1021, %v1051, 0.0
        %v1059 = vsel %vm1022, %v1051, 0.0
        %v1060 = vsel %vm1023, %v1051, 0.0
        %v1061 = vsel %vm1024, %v1051, 0.0
        %v1062 = vsel %vm1025, %v1051, 0.0
        %v1063 = vsel %vm1026, %v1051, 0.0
        %v1064 = vsel %vm1027, %v1051, 0.0
        %v1065 = vsel %vm1028, %v1051, 0.0
        %v1066 = vsel %vm1029, %v1051, 0.0
        %v1067 = vsel %vm1030, %v1051, 0.0
        %v1068 = vsel %vm1031, %v1051, 0.0
        %v1069 = vsel %vm1032, %v1051, 0.0
        %v1070 = vsel %vm1033, %v1051, 0.0
        %v1071 = vsel %vm1034, %v1051, 0.0
        %v1072 = vsel %vm1035, %v1051, 0.0
        %v1073 = vsel %vm1036, %v1051, 0.0
        %v1074 = vsel %vm1037, %v1051, 0.0
        %v1075 = vsel %vm1038, %v1051, 0.0
        %v1076 = vsel %vm1039, %v1051, 0.0
        %v1077 = vsel %vm1040, %v1051, 0.0
        %v1078 = vsel %vm1041, %v1051, 0.0
        %v1079 = vsel %vm1042, %v1051, 0.0
        %v1080 = vsel %vm1043, %v1051, 0.0
        %v1081 = vsel %vm1044, %v1051, 0.0
        %v1082 = vsel %vm1045, %v1051, 0.0
        %v1083 = vsel %vm1046, %v1051, 0.0
        %v1084 = vadd.f32 %v978, %v1052
        %v1085 = vadd.f32 %v979, %v1053
        %v1086 = vadd.f32 %v980, %v1054
        %v1087 = vadd.f32 %v981, %v1055
        %v1088 = vadd.f32 %v982, %v1056
        %v1089 = vadd.f32 %v983, %v1057
        %v1090 = vadd.f32 %v984, %v1058
        %v1091 = vadd.f32 %v985, %v1059
        %v1092 = vadd.f32 %v986, %v1060
        %v1093 = vadd.f32 %v987, %v1061
        %v1094 = vadd.f32 %v988, %v1062
        %v1095 = vadd.f32 %v989, %v1063
        %v1096 = vadd.f32 %v990, %v1064
        %v1097 = vadd.f32 %v991, %v1065
        %v1098 = vadd.f32 %v992, %v1066
        %v1099 = vadd.f32 %v993, %v1067
        %v1100 = vadd.f32 %v994, %v1068
        %v1101 = vadd.f32 %v995, %v1069
        %v1102 = vadd.f32 %v996, %v1070
        %v1103 = vadd.f32 %v997, %v1071
        %v1104 = vadd.f32 %v998, %v1072
        %v1105 = vadd.f32 %v999, %v1073
        %v1106 = vadd.f32 %v1000, %v1074
        %v1107 = vadd.f32 %v1001, %v1075
        %v1108 = vadd.f32 %v1002, %v1076
        %v1109 = vadd.f32 %v1003, %v1077
        %v1110 = vadd.f32 %v1004, %v1078
        %v1111 = vadd.f32 %v1005, %v1079
        %v1112 = vadd.f32 %v1006, %v1080
        %v1113 = vadd.f32 %v1007, %v1081
        %v1114 = vadd.f32 %v1008, %v1082
        %v1115 = vadd.f32 %v1009, %v1083
        %v1116 = vadd.s32 %v563, %v787
        %v1117 = vlaneseq
        %v1118 = vshrl.u32 %v1117, 7
        %v1119 = vsub.s32 0, %v1118
        %v1120 = vrot.slane %v1116, %v1119
        %vm1121 = vcmp.eq.s32.totalorder %v280, %v1120
        %vm1122 = vcmp.eq.s32.totalorder %v281, %v1120
        %vm1123 = vcmp.eq.s32.totalorder %v282, %v1120
        %vm1124 = vcmp.eq.s32.totalorder %v283, %v1120
        %vm1125 = vcmp.eq.s32.totalorder %v284, %v1120
        %vm1126 = vcmp.eq.s32.totalorder %v285, %v1120
        %vm1127 = vcmp.eq.s32.totalorder %v286, %v1120
        %vm1128 = vcmp.eq.s32.totalorder %v287, %v1120
        %vm1129 = vcmp.eq.s32.totalorder %v288, %v1120
        %vm1130 = vcmp.eq.s32.totalorder %v289, %v1120
        %vm1131 = vcmp.eq.s32.totalorder %v290, %v1120
        %vm1132 = vcmp.eq.s32.totalorder %v291, %v1120
        %vm1133 = vcmp.eq.s32.totalorder %v292, %v1120
        %vm1134 = vcmp.eq.s32.totalorder %v293, %v1120
        %vm1135 = vcmp.eq.s32.totalorder %v294, %v1120
        %vm1136 = vcmp.eq.s32.totalorder %v295, %v1120
        %vm1137 = vcmp.eq.s32.totalorder %v296, %v1120
        %vm1138 = vcmp.eq.s32.totalorder %v297, %v1120
        %vm1139 = vcmp.eq.s32.totalorder %v298, %v1120
        %vm1140 = vcmp.eq.s32.totalorder %v299, %v1120
        %vm1141 = vcmp.eq.s32.totalorder %v300, %v1120
        %vm1142 = vcmp.eq.s32.totalorder %v301, %v1120
        %vm1143 = vcmp.eq.s32.totalorder %v302, %v1120
        %vm1144 = vcmp.eq.s32.totalorder %v303, %v1120
        %vm1145 = vcmp.eq.s32.totalorder %v304, %v1120
        %vm1146 = vcmp.eq.s32.totalorder %v305, %v1120
        %vm1147 = vcmp.eq.s32.totalorder %v306, %v1120
        %vm1148 = vcmp.eq.s32.totalorder %v307, %v1120
        %vm1149 = vcmp.eq.s32.totalorder %v308, %v1120
        %vm1150 = vcmp.eq.s32.totalorder %v309, %v1120
        %vm1151 = vcmp.eq.s32.totalorder %v310, %v1120
        %vm1152 = vcmp.eq.s32.totalorder %v311, %v1120
        %v1153 = vmul.f32 %v797, %v793
        %v1154 = vlaneseq
        %v1155 = vshrl.u32 %v1154, 7
        %v1156 = vsub.s32 0, %v1155
        %v1157 = vrot.slane %v1153, %v1156
        %v1158 = vsel %vm1121, %v1157, 0.0
        %v1159 = vsel %vm1122, %v1157, 0.0
        %v1160 = vsel %vm1123, %v1157, 0.0
        %v1161 = vsel %vm1124, %v1157, 0.0
        %v1162 = vsel %vm1125, %v1157, 0.0
        %v1163 = vsel %vm1126, %v1157, 0.0
        %v1164 = vsel %vm1127, %v1157, 0.0
        %v1165 = vsel %vm1128, %v1157, 0.0
        %v1166 = vsel %vm1129, %v1157, 0.0
        %v1167 = vsel %vm1130, %v1157, 0.0
        %v1168 = vsel %vm1131, %v1157, 0.0
        %v1169 = vsel %vm1132, %v1157, 0.0
        %v1170 = vsel %vm1133, %v1157, 0.0
        %v1171 = vsel %vm1134, %v1157, 0.0
        %v1172 = vsel %vm1135, %v1157, 0.0
        %v1173 = vsel %vm1136, %v1157, 0.0
        %v1174 = vsel %vm1137, %v1157, 0.0
        %v1175 = vsel %vm1138, %v1157, 0.0
        %v1176 = vsel %vm1139, %v1157, 0.0
        %v1177 = vsel %vm1140, %v1157, 0.0
        %v1178 = vsel %vm1141, %v1157, 0.0
        %v1179 = vsel %vm1142, %v1157, 0.0
        %v1180 = vsel %vm1143, %v1157, 0.0
        %v1181 = vsel %vm1144, %v1157, 0.0
        %v1182 = vsel %vm1145, %v1157, 0.0
        %v1183 = vsel %vm1146, %v1157, 0.0
        %v1184 = vsel %vm1147, %v1157, 0.0
        %v1185 = vsel %vm1148, %v1157, 0.0
        %v1186 = vsel %vm1149, %v1157, 0.0
        %v1187 = vsel %vm1150, %v1157, 0.0
        %v1188 = vsel %vm1151, %v1157, 0.0
        %v1189 = vsel %vm1152, %v1157, 0.0
        %v1190 = vadd.f32 %v1084, %v1158
        %v1191 = vadd.f32 %v1085, %v1159
        %v1192 = vadd.f32 %v1086, %v1160
        %v1193 = vadd.f32 %v1087, %v1161
        %v1194 = vadd.f32 %v1088, %v1162
        %v1195 = vadd.f32 %v1089, %v1163
        %v1196 = vadd.f32 %v1090, %v1164
        %v1197 = vadd.f32 %v1091, %v1165
        %v1198 = vadd.f32 %v1092, %v1166
        %v1199 = vadd.f32 %v1093, %v1167
        %v1200 = vadd.f32 %v1094, %v1168
        %v1201 = vadd.f32 %v1095, %v1169
        %v1202 = vadd.f32 %v1096, %v1170
        %v1203 = vadd.f32 %v1097, %v1171
        %v1204 = vadd.f32 %v1098, %v1172
        %v1205 = vadd.f32 %v1099, %v1173
        %v1206 = vadd.f32 %v1100, %v1174
        %v1207 = vadd.f32 %v1101, %v1175
        %v1208 = vadd.f32 %v1102, %v1176
        %v1209 = vadd.f32 %v1103, %v1177
        %v1210 = vadd.f32 %v1104, %v1178
        %v1211 = vadd.f32 %v1105, %v1179
        %v1212 = vadd.f32 %v1106, %v1180
        %v1213 = vadd.f32 %v1107, %v1181
        %v1214 = vadd.f32 %v1108, %v1182
        %v1215 = vadd.f32 %v1109, %v1183
        %v1216 = vadd.f32 %v1110, %v1184
        %v1217 = vadd.f32 %v1111, %v1185
        %v1218 = vadd.f32 %v1112, %v1186
        %v1219 = vadd.f32 %v1113, %v1187
        %v1220 = vadd.f32 %v1114, %v1188
        %v1221 = vadd.f32 %v1115, %v1189
        %v1222 = vmul.f32 %v276, 1.5
        %v1223 = vmul.f32 %v1222, 0.5
        %v1224 = vadd.f32 %v266, %v1223
        %vm1225 = vcmp.lt.f32.partialorder %v1224, -1.0
        %vm1226 = vcmp.gt.f32.partialorder %v1224, 16.0
        %vm1227 = vmor %vm1225, %vm1226
        %vm1228 = vmor %vm1227, %vm321
        %vm1229 = vmor %vm1228, %vm323
        %v1230 = vmax.f32 %v1224, 0.0
        %v1231 = vcvt.f32.s32.to.zero.pseudo %v1230
        %vm1232 = vcmp.ge.s32.totalorder %v1231, 15
        %v1233 = vadd.s32 %v1231, 1
        %v1234 = vsel %vm1232, 15, %v1233
        %v1235 = vsel %vm1232, 15, %v1231
        %v1236 = vsel %vm1232, 15.0, %v1230
        %v1237 = vcvt.s32.f32 %v1235
        %v1238 = vsub.f32 %v1236, %v1237
        %v1239 = vsub.f32 1.0, %v1238
        %v1240 = vsel %vm1229, 0.0, %v278
        %v1241 = vmul.f32 %v1239, %v344
        %v1242 = vmul.f32 %v1239, %v342
        %v1243 = vmul.f32 %v1238, %v344
        %v1244 = vmul.f32 %v1238, %v342
        %v1245 = vmul.u32 %v1235, 16
        %v1246 = vadd.s32 %v1245, %v336
        %v1247 = vlaneseq
        %v1248 = vshrl.u32 %v1247, 7
        %v1249 = vsub.s32 0, %v1248
        %v1250 = vrot.slane %v1246, %v1249
        %vm1251 = vcmp.eq.s32.totalorder %v280, %v1250
        %vm1252 = vcmp.eq.s32.totalorder %v281, %v1250
        %vm1253 = vcmp.eq.s32.totalorder %v282, %v1250
        %vm1254 = vcmp.eq.s32.totalorder %v283, %v1250
        %vm1255 = vcmp.eq.s32.totalorder %v284, %v1250
        %vm1256 = vcmp.eq.s32.totalorder %v285, %v1250
        %vm1257 = vcmp.eq.s32.totalorder %v286, %v1250
        %vm1258 = vcmp.eq.s32.totalorder %v287, %v1250
        %vm1259 = vcmp.eq.s32.totalorder %v288, %v1250
        %vm1260 = vcmp.eq.s32.totalorder %v289, %v1250
        %vm1261 = vcmp.eq.s32.totalorder %v290, %v1250
        %vm1262 = vcmp.eq.s32.totalorder %v291, %v1250
        %vm1263 = vcmp.eq.s32.totalorder %v292, %v1250
        %vm1264 = vcmp.eq.s32.totalorder %v293, %v1250
        %vm1265 = vcmp.eq.s32.totalorder %v294, %v1250
        %vm1266 = vcmp.eq.s32.totalorder %v295, %v1250
        %vm1267 = vcmp.eq.s32.totalorder %v296, %v1250
        %vm1268 = vcmp.eq.s32.totalorder %v297, %v1250
        %vm1269 = vcmp.eq.s32.totalorder %v298, %v1250
        %vm1270 = vcmp.eq.s32.totalorder %v299, %v1250
        %vm1271 = vcmp.eq.s32.totalorder %v300, %v1250
        %vm1272 = vcmp.eq.s32.totalorder %v301, %v1250
        %vm1273 = vcmp.eq.s32.totalorder %v302, %v1250
        %vm1274 = vcmp.eq.s32.totalorder %v303, %v1250
        %vm1275 = vcmp.eq.s32.totalorder %v304, %v1250
        %vm1276 = vcmp.eq.s32.totalorder %v305, %v1250
        %vm1277 = vcmp.eq.s32.totalorder %v306, %v1250
        %vm1278 = vcmp.eq.s32.totalorder %v307, %v1250
        %vm1279 = vcmp.eq.s32.totalorder %v308, %v1250
        %vm1280 = vcmp.eq.s32.totalorder %v309, %v1250
        %vm1281 = vcmp.eq.s32.totalorder %v310, %v1250
        %vm1282 = vcmp.eq.s32.totalorder %v311, %v1250
        %v1283 = vmul.f32 %v1241, %v1240
        %v1284 = vlaneseq
        %v1285 = vshrl.u32 %v1284, 7
        %v1286 = vsub.s32 0, %v1285
        %v1287 = vrot.slane %v1283, %v1286
        %v1288 = vsel %vm1251, %v1287, 0.0
        %v1289 = vsel %vm1252, %v1287, 0.0
        %v1290 = vsel %vm1253, %v1287, 0.0
        %v1291 = vsel %vm1254, %v1287, 0.0
        %v1292 = vsel %vm1255, %v1287, 0.0
        %v1293 = vsel %vm1256, %v1287, 0.0
        %v1294 = vsel %vm1257, %v1287, 0.0
        %v1295 = vsel %vm1258, %v1287, 0.0
        %v1296 = vsel %vm1259, %v1287, 0.0
        %v1297 = vsel %vm1260, %v1287, 0.0
        %v1298 = vsel %vm1261, %v1287, 0.0
        %v1299 = vsel %vm1262, %v1287, 0.0
        %v1300 = vsel %vm1263, %v1287, 0.0
        %v1301 = vsel %vm1264, %v1287, 0.0
        %v1302 = vsel %vm1265, %v1287, 0.0
        %v1303 = vsel %vm1266, %v1287, 0.0
        %v1304 = vsel %vm1267, %v1287, 0.0
        %v1305 = vsel %vm1268, %v1287, 0.0
        %v1306 = vsel %vm1269, %v1287, 0.0
        %v1307 = vsel %vm1270, %v1287, 0.0
        %v1308 = vsel %vm1271, %v1287, 0.0
        %v1309 = vsel %vm1272, %v1287, 0.0
        %v1310 = vsel %vm1273, %v1287, 0.0
        %v1311 = vsel %vm1274, %v1287, 0.0
        %v1312 = vsel %vm1275, %v1287, 0.0
        %v1313 = vsel %vm1276, %v1287, 0.0
        %v1314 = vsel %vm1277, %v1287, 0.0
        %v1315 = vsel %vm1278, %v1287, 0.0
        %v1316 = vsel %vm1279, %v1287, 0.0
        %v1317 = vsel %vm1280, %v1287, 0.0
        %v1318 = vsel %vm1281, %v1287, 0.0
        %v1319 = vsel %vm1282, %v1287, 0.0
        %v1320 = vadd.f32 %v1190, %v1288
        %v1321 = vadd.f32 %v1191, %v1289
        %v1322 = vadd.f32 %v1192, %v1290
        %v1323 = vadd.f32 %v1193, %v1291
        %v1324 = vadd.f32 %v1194, %v1292
        %v1325 = vadd.f32 %v1195, %v1293
        %v1326 = vadd.f32 %v1196, %v1294
        %v1327 = vadd.f32 %v1197, %v1295
        %v1328 = vadd.f32 %v1198, %v1296
        %v1329 = vadd.f32 %v1199, %v1297
        %v1330 = vadd.f32 %v1200, %v1298
        %v1331 = vadd.f32 %v1201, %v1299
        %v1332 = vadd.f32 %v1202, %v1300
        %v1333 = vadd.f32 %v1203, %v1301
        %v1334 = vadd.f32 %v1204, %v1302
        %v1335 = vadd.f32 %v1205, %v1303
        %v1336 = vadd.f32 %v1206, %v1304
        %v1337 = vadd.f32 %v1207, %v1305
        %v1338 = vadd.f32 %v1208, %v1306
        %v1339 = vadd.f32 %v1209, %v1307
        %v1340 = vadd.f32 %v1210, %v1308
        %v1341 = vadd.f32 %v1211, %v1309
        %v1342 = vadd.f32 %v1212, %v1310
        %v1343 = vadd.f32 %v1213, %v1311
        %v1344 = vadd.f32 %v1214, %v1312
        %v1345 = vadd.f32 %v1215, %v1313
        %v1346 = vadd.f32 %v1216, %v1314
        %v1347 = vadd.f32 %v1217, %v1315
        %v1348 = vadd.f32 %v1218, %v1316
        %v1349 = vadd.f32 %v1219, %v1317
        %v1350 = vadd.f32 %v1220, %v1318
        %v1351 = vadd.f32 %v1221, %v1319
        %v1352 = vadd.s32 %v1245, %v334
        %v1353 = vlaneseq
        %v1354 = vshrl.u32 %v1353, 7
        %v1355 = vsub.s32 0, %v1354
        %v1356 = vrot.slane %v1352, %v1355
        %vm1357 = vcmp.eq.s32.totalorder %v280, %v1356
        %vm1358 = vcmp.eq.s32.totalorder %v281, %v1356
        %vm1359 = vcmp.eq.s32.totalorder %v282, %v1356
        %vm1360 = vcmp.eq.s32.totalorder %v283, %v1356
        %vm1361 = vcmp.eq.s32.totalorder %v284, %v1356
        %vm1362 = vcmp.eq.s32.totalorder %v285, %v1356
        %vm1363 = vcmp.eq.s32.totalorder %v286, %v1356
        %vm1364 = vcmp.eq.s32.totalorder %v287, %v1356
        %vm1365 = vcmp.eq.s32.totalorder %v288, %v1356
        %vm1366 = vcmp.eq.s32.totalorder %v289, %v1356
        %vm1367 = vcmp.eq.s32.totalorder %v290, %v1356
        %vm1368 = vcmp.eq.s32.totalorder %v291, %v1356
        %vm1369 = vcmp.eq.s32.totalorder %v292, %v1356
        %vm1370 = vcmp.eq.s32.totalorder %v293, %v1356
        %vm1371 = vcmp.eq.s32.totalorder %v294, %v1356
        %vm1372 = vcmp.eq.s32.totalorder %v295, %v1356
        %vm1373 = vcmp.eq.s32.totalorder %v296, %v1356
        %vm1374 = vcmp.eq.s32.totalorder %v297, %v1356
        %vm1375 = vcmp.eq.s32.totalorder %v298, %v1356
        %vm1376 = vcmp.eq.s32.totalorder %v299, %v1356
        %vm1377 = vcmp.eq.s32.totalorder %v300, %v1356
        %vm1378 = vcmp.eq.s32.totalorder %v301, %v1356
        %vm1379 = vcmp.eq.s32.totalorder %v302, %v1356
        %vm1380 = vcmp.eq.s32.totalorder %v303, %v1356
        %vm1381 = vcmp.eq.s32.totalorder %v304, %v1356
        %vm1382 = vcmp.eq.s32.totalorder %v305, %v1356
        %vm1383 = vcmp.eq.s32.totalorder %v306, %v1356
        %vm1384 = vcmp.eq.s32.totalorder %v307, %v1356
        %vm1385 = vcmp.eq.s32.totalorder %v308, %v1356
        %vm1386 = vcmp.eq.s32.totalorder %v309, %v1356
        %vm1387 = vcmp.eq.s32.totalorder %v310, %v1356
        %vm1388 = vcmp.eq.s32.totalorder %v311, %v1356
        %v1389 = vmul.f32 %v1242, %v1240
        %v1390 = vlaneseq
        %v1391 = vshrl.u32 %v1390, 7
        %v1392 = vsub.s32 0, %v1391
        %v1393 = vrot.slane %v1389, %v1392
        %v1394 = vsel %vm1357, %v1393, 0.0
        %v1395 = vsel %vm1358, %v1393, 0.0
        %v1396 = vsel %vm1359, %v1393, 0.0
        %v1397 = vsel %vm1360, %v1393, 0.0
        %v1398 = vsel %vm1361, %v1393, 0.0
        %v1399 = vsel %vm1362, %v1393, 0.0
        %v1400 = vsel %vm1363, %v1393, 0.0
        %v1401 = vsel %vm1364, %v1393, 0.0
        %v1402 = vsel %vm1365, %v1393, 0.0
        %v1403 = vsel %vm1366, %v1393, 0.0
        %v1404 = vsel %vm1367, %v1393, 0.0
        %v1405 = vsel %vm1368, %v1393, 0.0
        %v1406 = vsel %vm1369, %v1393, 0.0
        %v1407 = vsel %vm1370, %v1393, 0.0
        %v1408 = vsel %vm1371, %v1393, 0.0
        %v1409 = vsel %vm1372, %v1393, 0.0
        %v1410 = vsel %vm1373, %v1393, 0.0
        %v1411 = vsel %vm1374, %v1393, 0.0
        %v1412 = vsel %vm1375, %v1393, 0.0
        %v1413 = vsel %vm1376, %v1393, 0.0
        %v1414 = vsel %vm1377, %v1393, 0.0
        %v1415 = vsel %vm1378, %v1393, 0.0
        %v1416 = vsel %vm1379, %v1393, 0.0
        %v1417 = vsel %vm1380, %v1393, 0.0
        %v1418 = vsel %vm1381, %v1393, 0.0
        %v1419 = vsel %vm1382, %v1393, 0.0
        %v1420 = vsel %vm1383, %v1393, 0.0
        %v1421 = vsel %vm1384, %v1393, 0.0
        %v1422 = vsel %vm1385, %v1393, 0.0
        %v1423 = vsel %vm1386, %v1393, 0.0
        %v1424 = vsel %vm1387, %v1393, 0.0
        %v1425 = vsel %vm1388, %v1393, 0.0
        %v1426 = vadd.f32 %v1320, %v1394
        %v1427 = vadd.f32 %v1321, %v1395
        %v1428 = vadd.f32 %v1322, %v1396
        %v1429 = vadd.f32 %v1323, %v1397
        %v1430 = vadd.f32 %v1324, %v1398
        %v1431 = vadd.f32 %v1325, %v1399
        %v1432 = vadd.f32 %v1326, %v1400
        %v1433 = vadd.f32 %v1327, %v1401
        %v1434 = vadd.f32 %v1328, %v1402
        %v1435 = vadd.f32 %v1329, %v1403
        %v1436 = vadd.f32 %v1330, %v1404
        %v1437 = vadd.f32 %v1331, %v1405
        %v1438 = vadd.f32 %v1332, %v1406
        %v1439 = vadd.f32 %v1333, %v1407
        %v1440 = vadd.f32 %v1334, %v1408
        %v1441 = vadd.f32 %v1335, %v1409
        %v1442 = vadd.f32 %v1336, %v1410
        %v1443 = vadd.f32 %v1337, %v1411
        %v1444 = vadd.f32 %v1338, %v1412
        %v1445 = vadd.f32 %v1339, %v1413
        %v1446 = vadd.f32 %v1340, %v1414
        %v1447 = vadd.f32 %v1341, %v1415
        %v1448 = vadd.f32 %v1342, %v1416
        %v1449 = vadd.f32 %v1343, %v1417
        %v1450 = vadd.f32 %v1344, %v1418
        %v1451 = vadd.f32 %v1345, %v1419
        %v1452 = vadd.f32 %v1346, %v1420
        %v1453 = vadd.f32 %v1347, %v1421
        %v1454 = vadd.f32 %v1348, %v1422
        %v1455 = vadd.f32 %v1349, %v1423
        %v1456 = vadd.f32 %v1350, %v1424
        %v1457 = vadd.f32 %v1351, %v1425
        %v1458 = vmul.u32 %v1234, 16
        %v1459 = vadd.s32 %v1458, %v336
        %v1460 = vlaneseq
        %v1461 = vshrl.u32 %v1460, 7
        %v1462 = vsub.s32 0, %v1461
        %v1463 = vrot.slane %v1459, %v1462
        %vm1464 = vcmp.eq.s32.totalorder %v280, %v1463
        %vm1465 = vcmp.eq.s32.totalorder %v281, %v1463
        %vm1466 = vcmp.eq.s32.totalorder %v282, %v1463
        %vm1467 = vcmp.eq.s32.totalorder %v283, %v1463
        %vm1468 = vcmp.eq.s32.totalorder %v284, %v1463
        %vm1469 = vcmp.eq.s32.totalorder %v285, %v1463
        %vm1470 = vcmp.eq.s32.totalorder %v286, %v1463
        %vm1471 = vcmp.eq.s32.totalorder %v287, %v1463
        %vm1472 = vcmp.eq.s32.totalorder %v288, %v1463
        %vm1473 = vcmp.eq.s32.totalorder %v289, %v1463
        %vm1474 = vcmp.eq.s32.totalorder %v290, %v1463
        %vm1475 = vcmp.eq.s32.totalorder %v291, %v1463
        %vm1476 = vcmp.eq.s32.totalorder %v292, %v1463
        %vm1477 = vcmp.eq.s32.totalorder %v293, %v1463
        %vm1478 = vcmp.eq.s32.totalorder %v294, %v1463
        %vm1479 = vcmp.eq.s32.totalorder %v295, %v1463
        %vm1480 = vcmp.eq.s32.totalorder %v296, %v1463
        %vm1481 = vcmp.eq.s32.totalorder %v297, %v1463
        %vm1482 = vcmp.eq.s32.totalorder %v298, %v1463
        %vm1483 = vcmp.eq.s32.totalorder %v299, %v1463
        %vm1484 = vcmp.eq.s32.totalorder %v300, %v1463
        %vm1485 = vcmp.eq.s32.totalorder %v301, %v1463
        %vm1486 = vcmp.eq.s32.totalorder %v302, %v1463
        %vm1487 = vcmp.eq.s32.totalorder %v303, %v1463
        %vm1488 = vcmp.eq.s32.totalorder %v304, %v1463
        %vm1489 = vcmp.eq.s32.totalorder %v305, %v1463
        %vm1490 = vcmp.eq.s32.totalorder %v306, %v1463
        %vm1491 = vcmp.eq.s32.totalorder %v307, %v1463
        %vm1492 = vcmp.eq.s32.totalorder %v308, %v1463
        %vm1493 = vcmp.eq.s32.totalorder %v309, %v1463
        %vm1494 = vcmp.eq.s32.totalorder %v310, %v1463
        %vm1495 = vcmp.eq.s32.totalorder %v311, %v1463
        %v1496 = vmul.f32 %v1243, %v1240
        %v1497 = vlaneseq
        %v1498 = vshrl.u32 %v1497, 7
        %v1499 = vsub.s32 0, %v1498
        %v1500 = vrot.slane %v1496, %v1499
        %v1501 = vsel %vm1464, %v1500, 0.0
        %v1502 = vsel %vm1465, %v1500, 0.0
        %v1503 = vsel %vm1466, %v1500, 0.0
        %v1504 = vsel %vm1467, %v1500, 0.0
        %v1505 = vsel %vm1468, %v1500, 0.0
        %v1506 = vsel %vm1469, %v1500, 0.0
        %v1507 = vsel %vm1470, %v1500, 0.0
        %v1508 = vsel %vm1471, %v1500, 0.0
        %v1509 = vsel %vm1472, %v1500, 0.0
        %v1510 = vsel %vm1473, %v1500, 0.0
        %v1511 = vsel %vm1474, %v1500, 0.0
        %v1512 = vsel %vm1475, %v1500, 0.0
        %v1513 = vsel %vm1476, %v1500, 0.0
        %v1514 = vsel %vm1477, %v1500, 0.0
        %v1515 = vsel %vm1478, %v1500, 0.0
        %v1516 = vsel %vm1479, %v1500, 0.0
        %v1517 = vsel %vm1480, %v1500, 0.0
        %v1518 = vsel %vm1481, %v1500, 0.0
        %v1519 = vsel %vm1482, %v1500, 0.0
        %v1520 = vsel %vm1483, %v1500, 0.0
        %v1521 = vsel %vm1484, %v1500, 0.0
        %v1522 = vsel %vm1485, %v1500, 0.0
        %v1523 = vsel %vm1486, %v1500, 0.0
        %v1524 = vsel %vm1487, %v1500, 0.0
        %v1525 = vsel %vm1488, %v1500, 0.0
        %v1526 = vsel %vm1489, %v1500, 0.0
        %v1527 = vsel %vm1490, %v1500, 0.0
        %v1528 = vsel %vm1491, %v1500, 0.0
        %v1529 = vsel %vm1492, %v1500, 0.0
        %v1530 = vsel %vm1493, %v1500, 0.0
        %v1531 = vsel %vm1494, %v1500, 0.0
        %v1532 = vsel %vm1495, %v1500, 0.0
        %v1533 = vadd.f32 %v1426, %v1501
        %v1534 = vadd.f32 %v1427, %v1502
        %v1535 = vadd.f32 %v1428, %v1503
        %v1536 = vadd.f32 %v1429, %v1504
        %v1537 = vadd.f32 %v1430, %v1505
        %v1538 = vadd.f32 %v1431, %v1506
        %v1539 = vadd.f32 %v1432, %v1507
        %v1540 = vadd.f32 %v1433, %v1508
        %v1541 = vadd.f32 %v1434, %v1509
        %v1542 = vadd.f32 %v1435, %v1510
        %v1543 = vadd.f32 %v1436, %v1511
        %v1544 = vadd.f32 %v1437, %v1512
        %v1545 = vadd.f32 %v1438, %v1513
        %v1546 = vadd.f32 %v1439, %v1514
        %v1547 = vadd.f32 %v1440, %v1515
        %v1548 = vadd.f32 %v1441, %v1516
        %v1549 = vadd.f32 %v1442, %v1517
        %v1550 = vadd.f32 %v1443, %v1518
        %v1551 = vadd.f32 %v1444, %v1519
        %v1552 = vadd.f32 %v1445, %v1520
        %v1553 = vadd.f32 %v1446, %v1521
        %v1554 = vadd.f32 %v1447, %v1522
        %v1555 = vadd.f32 %v1448, %v1523
        %v1556 = vadd.f32 %v1449, %v1524
        %v1557 = vadd.f32 %v1450, %v1525
        %v1558 = vadd.f32 %v1451, %v1526
        %v1559 = vadd.f32 %v1452, %v1527
        %v1560 = vadd.f32 %v1453, %v1528
        %v1561 = vadd.f32 %v1454, %v1529
        %v1562 = vadd.f32 %v1455, %v1530
        %v1563 = vadd.f32 %v1456, %v1531
        %v1564 = vadd.f32 %v1457, %v1532
        %v1565 = vadd.s32 %v1458, %v334
        %v1566 = vlaneseq
        %v1567 = vshrl.u32 %v1566, 7
        %v1568 = vsub.s32 0, %v1567
        %v1569 = vrot.slane %v1565, %v1568
        %vm1570 = vcmp.eq.s32.totalorder %v280, %v1569
        %vm1571 = vcmp.eq.s32.totalorder %v281, %v1569
        %vm1572 = vcmp.eq.s32.totalorder %v282, %v1569
        %vm1573 = vcmp.eq.s32.totalorder %v283, %v1569
        %vm1574 = vcmp.eq.s32.totalorder %v284, %v1569
        %vm1575 = vcmp.eq.s32.totalorder %v285, %v1569
        %vm1576 = vcmp.eq.s32.totalorder %v286, %v1569
        %vm1577 = vcmp.eq.s32.totalorder %v287, %v1569
        %vm1578 = vcmp.eq.s32.totalorder %v288, %v1569
        %vm1579 = vcmp.eq.s32.totalorder %v289, %v1569
        %vm1580 = vcmp.eq.s32.totalorder %v290, %v1569
        %vm1581 = vcmp.eq.s32.totalorder %v291, %v1569
        %vm1582 = vcmp.eq.s32.totalorder %v292, %v1569
        %vm1583 = vcmp.eq.s32.totalorder %v293, %v1569
        %vm1584 = vcmp.eq.s32.totalorder %v294, %v1569
        %vm1585 = vcmp.eq.s32.totalorder %v295, %v1569
        %vm1586 = vcmp.eq.s32.totalorder %v296, %v1569
        %vm1587 = vcmp.eq.s32.totalorder %v297, %v1569
        %vm1588 = vcmp.eq.s32.totalorder %v298, %v1569
        %vm1589 = vcmp.eq.s32.totalorder %v299, %v1569
        %vm1590 = vcmp.eq.s32.totalorder %v300, %v1569
        %vm1591 = vcmp.eq.s32.totalorder %v301, %v1569
        %vm1592 = vcmp.eq.s32.totalorder %v302, %v1569
        %vm1593 = vcmp.eq.s32.totalorder %v303, %v1569
        %vm1594 = vcmp.eq.s32.totalorder %v304, %v1569
        %vm1595 = vcmp.eq.s32.totalorder %v305, %v1569
        %vm1596 = vcmp.eq.s32.totalorder %v306, %v1569
        %vm1597 = vcmp.eq.s32.totalorder %v307, %v1569
        %vm1598 = vcmp.eq.s32.totalorder %v308, %v1569
        %vm1599 = vcmp.eq.s32.totalorder %v309, %v1569
        %vm1600 = vcmp.eq.s32.totalorder %v310, %v1569
        %vm1601 = vcmp.eq.s32.totalorder %v311, %v1569
        %v1602 = vmul.f32 %v1244, %v1240
        %v1603 = vlaneseq
        %v1604 = vshrl.u32 %v1603, 7
        %v1605 = vsub.s32 0, %v1604
        %v1606 = vrot.slane %v1602, %v1605
        %v1607 = vsel %vm1570, %v1606, 0.0
        %v1608 = vsel %vm1571, %v1606, 0.0
        %v1609 = vsel %vm1572, %v1606, 0.0
        %v1610 = vsel %vm1573, %v1606, 0.0
        %v1611 = vsel %vm1574, %v1606, 0.0
        %v1612 = vsel %vm1575, %v1606, 0.0
        %v1613 = vsel %vm1576, %v1606, 0.0
        %v1614 = vsel %vm1577, %v1606, 0.0
        %v1615 = vsel %vm1578, %v1606, 0.0
        %v1616 = vsel %vm1579, %v1606, 0.0
        %v1617 = vsel %vm1580, %v1606, 0.0
        %v1618 = vsel %vm1581, %v1606, 0.0
        %v1619 = vsel %vm1582, %v1606, 0.0
        %v1620 = vsel %vm1583, %v1606, 0.0
        %v1621 = vsel %vm1584, %v1606, 0.0
        %v1622 = vsel %vm1585, %v1606, 0.0
        %v1623 = vsel %vm1586, %v1606, 0.0
        %v1624 = vsel %vm1587, %v1606, 0.0
        %v1625 = vsel %vm1588, %v1606, 0.0
        %v1626 = vsel %vm1589, %v1606, 0.0
        %v1627 = vsel %vm1590, %v1606, 0.0
        %v1628 = vsel %vm1591, %v1606, 0.0
        %v1629 = vsel %vm1592, %v1606, 0.0
        %v1630 = vsel %vm1593, %v1606, 0.0
        %v1631 = vsel %vm1594, %v1606, 0.0
        %v1632 = vsel %vm1595, %v1606, 0.0
        %v1633 = vsel %vm1596, %v1606, 0.0
        %v1634 = vsel %vm1597, %v1606, 0.0
        %v1635 = vsel %vm1598, %v1606, 0.0
        %v1636 = vsel %vm1599, %v1606, 0.0
        %v1637 = vsel %vm1600, %v1606, 0.0
        %v1638 = vsel %vm1601, %v1606, 0.0
        %v1639 = vadd.f32 %v1533, %v1607
        %v1640 = vadd.f32 %v1534, %v1608
        %v1641 = vadd.f32 %v1535, %v1609
        %v1642 = vadd.f32 %v1536, %v1610
        %v1643 = vadd.f32 %v1537, %v1611
        %v1644 = vadd.f32 %v1538, %v1612
        %v1645 = vadd.f32 %v1539, %v1613
        %v1646 = vadd.f32 %v1540, %v1614
        %v1647 = vadd.f32 %v1541, %v1615
        %v1648 = vadd.f32 %v1542, %v1616
        %v1649 = vadd.f32 %v1543, %v1617
        %v1650 = vadd.f32 %v1544, %v1618
        %v1651 = vadd.f32 %v1545, %v1619
        %v1652 = vadd.f32 %v1546, %v1620
        %v1653 = vadd.f32 %v1547, %v1621
        %v1654 = vadd.f32 %v1548, %v1622
        %v1655 = vadd.f32 %v1549, %v1623
        %v1656 = vadd.f32 %v1550, %v1624
        %v1657 = vadd.f32 %v1551, %v1625
        %v1658 = vadd.f32 %v1552, %v1626
        %v1659 = vadd.f32 %v1553, %v1627
        %v1660 = vadd.f32 %v1554, %v1628
        %v1661 = vadd.f32 %v1555, %v1629
        %v1662 = vadd.f32 %v1556, %v1630
        %v1663 = vadd.f32 %v1557, %v1631
        %v1664 = vadd.f32 %v1558, %v1632
        %v1665 = vadd.f32 %v1559, %v1633
        %v1666 = vadd.f32 %v1560, %v1634
        %v1667 = vadd.f32 %v1561, %v1635
        %v1668 = vadd.f32 %v1562, %v1636
        %v1669 = vadd.f32 %v1563, %v1637
        %v1670 = vadd.f32 %v1564, %v1638
        %vm1671 = vmor %vm1227, %vm779
        %vm1672 = vmor %vm1671, %vm781
        %v1673 = vsel %vm1672, 0.0, %v278
        %v1674 = vmul.f32 %v1239, %v792
        %v1675 = vmul.f32 %v1239, %v791
        %v1676 = vmul.f32 %v1238, %v792
        %v1677 = vmul.f32 %v1238, %v791
        %v1678 = vadd.s32 %v1245, %v788
        %v1679 = vlaneseq
        %v1680 = vshrl.u32 %v1679, 7
        %v1681 = vsub.s32 0, %v1680
        %v1682 = vrot.slane %v1678, %v1681
        %vm1683 = vcmp.eq.s32.totalorder %v280, %v1682
        %vm1684 = vcmp.eq.s32.totalorder %v281, %v1682
        %vm1685 = vcmp.eq.s32.totalorder %v282, %v1682
        %vm1686 = vcmp.eq.s32.totalorder %v283, %v1682
        %vm1687 = vcmp.eq.s32.totalorder %v284, %v1682
        %vm1688 = vcmp.eq.s32.totalorder %v285, %v1682
        %vm1689 = vcmp.eq.s32.totalorder %v286, %v1682
        %vm1690 = vcmp.eq.s32.totalorder %v287, %v1682
        %vm1691 = vcmp.eq.s32.totalorder %v288, %v1682
        %vm1692 = vcmp.eq.s32.totalorder %v289, %v1682
        %vm1693 = vcmp.eq.s32.totalorder %v290, %v1682
        %vm1694 = vcmp.eq.s32.totalorder %v291, %v1682
        %vm1695 = vcmp.eq.s32.totalorder %v292, %v1682
        %vm1696 = vcmp.eq.s32.totalorder %v293, %v1682
        %vm1697 = vcmp.eq.s32.totalorder %v294, %v1682
        %vm1698 = vcmp.eq.s32.totalorder %v295, %v1682
        %vm1699 = vcmp.eq.s32.totalorder %v296, %v1682
        %vm1700 = vcmp.eq.s32.totalorder %v297, %v1682
        %vm1701 = vcmp.eq.s32.totalorder %v298, %v1682
        %vm1702 = vcmp.eq.s32.totalorder %v299, %v1682
        %vm1703 = vcmp.eq.s32.totalorder %v300, %v1682
        %vm1704 = vcmp.eq.s32.totalorder %v301, %v1682
        %vm1705 = vcmp.eq.s32.totalorder %v302, %v1682
        %vm1706 = vcmp.eq.s32.totalorder %v303, %v1682
        %vm1707 = vcmp.eq.s32.totalorder %v304, %v1682
        %vm1708 = vcmp.eq.s32.totalorder %v305, %v1682
        %vm1709 = vcmp.eq.s32.totalorder %v306, %v1682
        %vm1710 = vcmp.eq.s32.totalorder %v307, %v1682
        %vm1711 = vcmp.eq.s32.totalorder %v308, %v1682
        %vm1712 = vcmp.eq.s32.totalorder %v309, %v1682
        %vm1713 = vcmp.eq.s32.totalorder %v310, %v1682
        %vm1714 = vcmp.eq.s32.totalorder %v311, %v1682
        %v1715 = vmul.f32 %v1674, %v1673
        %v1716 = vlaneseq
        %v1717 = vshrl.u32 %v1716, 7
        %v1718 = vsub.s32 0, %v1717
        %v1719 = vrot.slane %v1715, %v1718
        %v1720 = vsel %vm1683, %v1719, 0.0
        %v1721 = vsel %vm1684, %v1719, 0.0
        %v1722 = vsel %vm1685, %v1719, 0.0
        %v1723 = vsel %vm1686, %v1719, 0.0
        %v1724 = vsel %vm1687, %v1719, 0.0
        %v1725 = vsel %vm1688, %v1719, 0.0
        %v1726 = vsel %vm1689, %v1719, 0.0
        %v1727 = vsel %vm1690, %v1719, 0.0
        %v1728 = vsel %vm1691, %v1719, 0.0
        %v1729 = vsel %vm1692, %v1719, 0.0
        %v1730 = vsel %vm1693, %v1719, 0.0
        %v1731 = vsel %vm1694, %v1719, 0.0
        %v1732 = vsel %vm1695, %v1719, 0.0
        %v1733 = vsel %vm1696, %v1719, 0.0
        %v1734 = vsel %vm1697, %v1719, 0.0
        %v1735 = vsel %vm1698, %v1719, 0.0
        %v1736 = vsel %vm1699, %v1719, 0.0
        %v1737 = vsel %vm1700, %v1719, 0.0
        %v1738 = vsel %vm1701, %v1719, 0.0
        %v1739 = vsel %vm1702, %v1719, 0.0
        %v1740 = vsel %vm1703, %v1719, 0.0
        %v1741 = vsel %vm1704, %v1719, 0.0
        %v1742 = vsel %vm1705, %v1719, 0.0
        %v1743 = vsel %vm1706, %v1719, 0.0
        %v1744 = vsel %vm1707, %v1719, 0.0
        %v1745 = vsel %vm1708, %v1719, 0.0
        %v1746 = vsel %vm1709, %v1719, 0.0
        %v1747 = vsel %vm1710, %v1719, 0.0
        %v1748 = vsel %vm1711, %v1719, 0.0
        %v1749 = vsel %vm1712, %v1719, 0.0
        %v1750 = vsel %vm1713, %v1719, 0.0
        %v1751 = vsel %vm1714, %v1719, 0.0
        %v1752 = vadd.f32 %v1639, %v1720
        %v1753 = vadd.f32 %v1640, %v1721
        %v1754 = vadd.f32 %v1641, %v1722
        %v1755 = vadd.f32 %v1642, %v1723
        %v1756 = vadd.f32 %v1643, %v1724
        %v1757 = vadd.f32 %v1644, %v1725
        %v1758 = vadd.f32 %v1645, %v1726
        %v1759 = vadd.f32 %v1646, %v1727
        %v1760 = vadd.f32 %v1647, %v1728
        %v1761 = vadd.f32 %v1648, %v1729
        %v1762 = vadd.f32 %v1649, %v1730
        %v1763 = vadd.f32 %v1650, %v1731
        %v1764 = vadd.f32 %v1651, %v1732
        %v1765 = vadd.f32 %v1652, %v1733
        %v1766 = vadd.f32 %v1653, %v1734
        %v1767 = vadd.f32 %v1654, %v1735
        %v1768 = vadd.f32 %v1655, %v1736
        %v1769 = vadd.f32 %v1656, %v1737
        %v1770 = vadd.f32 %v1657, %v1738
        %v1771 = vadd.f32 %v1658, %v1739
        %v1772 = vadd.f32 %v1659, %v1740
        %v1773 = vadd.f32 %v1660, %v1741
        %v1774 = vadd.f32 %v1661, %v1742
        %v1775 = vadd.f32 %v1662, %v1743
        %v1776 = vadd.f32 %v1663, %v1744
        %v1777 = vadd.f32 %v1664, %v1745
        %v1778 = vadd.f32 %v1665, %v1746
        %v1779 = vadd.f32 %v1666, %v1747
        %v1780 = vadd.f32 %v1667, %v1748
        %v1781 = vadd.f32 %v1668, %v1749
        %v1782 = vadd.f32 %v1669, %v1750
        %v1783 = vadd.f32 %v1670, %v1751
        %v1784 = vadd.s32 %v1245, %v787
        %v1785 = vlaneseq
        %v1786 = vshrl.u32 %v1785, 7
        %v1787 = vsub.s32 0, %v1786
        %v1788 = vrot.slane %v1784, %v1787
        %vm1789 = vcmp.eq.s32.totalorder %v280, %v1788
        %vm1790 = vcmp.eq.s32.totalorder %v281, %v1788
        %vm1791 = vcmp.eq.s32.totalorder %v282, %v1788
        %vm1792 = vcmp.eq.s32.totalorder %v283, %v1788
        %vm1793 = vcmp.eq.s32.totalorder %v284, %v1788
        %vm1794 = vcmp.eq.s32.totalorder %v285, %v1788
        %vm1795 = vcmp.eq.s32.totalorder %v286, %v1788
        %vm1796 = vcmp.eq.s32.totalorder %v287, %v1788
        %vm1797 = vcmp.eq.s32.totalorder %v288, %v1788
        %vm1798 = vcmp.eq.s32.totalorder %v289, %v1788
        %vm1799 = vcmp.eq.s32.totalorder %v290, %v1788
        %vm1800 = vcmp.eq.s32.totalorder %v291, %v1788
        %vm1801 = vcmp.eq.s32.totalorder %v292, %v1788
        %vm1802 = vcmp.eq.s32.totalorder %v293, %v1788
        %vm1803 = vcmp.eq.s32.totalorder %v294, %v1788
        %vm1804 = vcmp.eq.s32.totalorder %v295, %v1788
        %vm1805 = vcmp.eq.s32.totalorder %v296, %v1788
        %vm1806 = vcmp.eq.s32.totalorder %v297, %v1788
        %vm1807 = vcmp.eq.s32.totalorder %v298, %v1788
        %vm1808 = vcmp.eq.s32.totalorder %v299, %v1788
        %vm1809 = vcmp.eq.s32.totalorder %v300, %v1788
        %vm1810 = vcmp.eq.s32.totalorder %v301, %v1788
        %vm1811 = vcmp.eq.s32.totalorder %v302, %v1788
        %vm1812 = vcmp.eq.s32.totalorder %v303, %v1788
        %vm1813 = vcmp.eq.s32.totalorder %v304, %v1788
        %vm1814 = vcmp.eq.s32.totalorder %v305, %v1788
        %vm1815 = vcmp.eq.s32.totalorder %v306, %v1788
        %vm1816 = vcmp.eq.s32.totalorder %v307, %v1788
        %vm1817 = vcmp.eq.s32.totalorder %v308, %v1788
        %vm1818 = vcmp.eq.s32.totalorder %v309, %v1788
        %vm1819 = vcmp.eq.s32.totalorder %v310, %v1788
        %vm1820 = vcmp.eq.s32.totalorder %v311, %v1788
        %v1821 = vmul.f32 %v1675, %v1673
        %v1822 = vlaneseq
        %v1823 = vshrl.u32 %v1822, 7
        %v1824 = vsub.s32 0, %v1823
        %v1825 = vrot.slane %v1821, %v1824
        %v1826 = vsel %vm1789, %v1825, 0.0
        %v1827 = vsel %vm1790, %v1825, 0.0
        %v1828 = vsel %vm1791, %v1825, 0.0
        %v1829 = vsel %vm1792, %v1825, 0.0
        %v1830 = vsel %vm1793, %v1825, 0.0
        %v1831 = vsel %vm1794, %v1825, 0.0
        %v1832 = vsel %vm1795, %v1825, 0.0
        %v1833 = vsel %vm1796, %v1825, 0.0
        %v1834 = vsel %vm1797, %v1825, 0.0
        %v1835 = vsel %vm1798, %v1825, 0.0
        %v1836 = vsel %vm1799, %v1825, 0.0
        %v1837 = vsel %vm1800, %v1825, 0.0
        %v1838 = vsel %vm1801, %v1825, 0.0
        %v1839 = vsel %vm1802, %v1825, 0.0
        %v1840 = vsel %vm1803, %v1825, 0.0
        %v1841 = vsel %vm1804, %v1825, 0.0
        %v1842 = vsel %vm1805, %v1825, 0.0
        %v1843 = vsel %vm1806, %v1825, 0.0
        %v1844 = vsel %vm1807, %v1825, 0.0
        %v1845 = vsel %vm1808, %v1825, 0.0
        %v1846 = vsel %vm1809, %v1825, 0.0
        %v1847 = vsel %vm1810, %v1825, 0.0
        %v1848 = vsel %vm1811, %v1825, 0.0
        %v1849 = vsel %vm1812, %v1825, 0.0
        %v1850 = vsel %vm1813, %v1825, 0.0
        %v1851 = vsel %vm1814, %v1825, 0.0
        %v1852 = vsel %vm1815, %v1825, 0.0
        %v1853 = vsel %vm1816, %v1825, 0.0
        %v1854 = vsel %vm1817, %v1825, 0.0
        %v1855 = vsel %vm1818, %v1825, 0.0
        %v1856 = vsel %vm1819, %v1825, 0.0
        %v1857 = vsel %vm1820, %v1825, 0.0
        %v1858 = vadd.f32 %v1752, %v1826
        %v1859 = vadd.f32 %v1753, %v1827
        %v1860 = vadd.f32 %v1754, %v1828
        %v1861 = vadd.f32 %v1755, %v1829
        %v1862 = vadd.f32 %v1756, %v1830
        %v1863 = vadd.f32 %v1757, %v1831
        %v1864 = vadd.f32 %v1758, %v1832
        %v1865 = vadd.f32 %v1759, %v1833
        %v1866 = vadd.f32 %v1760, %v1834
        %v1867 = vadd.f32 %v1761, %v1835
        %v1868 = vadd.f32 %v1762, %v1836
        %v1869 = vadd.f32 %v1763, %v1837
        %v1870 = vadd.f32 %v1764, %v1838
        %v1871 = vadd.f32 %v1765, %v1839
        %v1872 = vadd.f32 %v1766, %v1840
        %v1873 = vadd.f32 %v1767, %v1841
        %v1874 = vadd.f32 %v1768, %v1842
        %v1875 = vadd.f32 %v1769, %v1843
        %v1876 = vadd.f32 %v1770, %v1844
        %v1877 = vadd.f32 %v1771, %v1845
        %v1878 = vadd.f32 %v1772, %v1846
        %v1879 = vadd.f32 %v1773, %v1847
        %v1880 = vadd.f32 %v1774, %v1848
        %v1881 = vadd.f32 %v1775, %v1849
        %v1882 = vadd.f32 %v1776, %v1850
        %v1883 = vadd.f32 %v1777, %v1851
        %v1884 = vadd.f32 %v1778, %v1852
        %v1885 = vadd.f32 %v1779, %v1853
        %v1886 = vadd.f32 %v1780, %v1854
        %v1887 = vadd.f32 %v1781, %v1855
        %v1888 = vadd.f32 %v1782, %v1856
        %v1889 = vadd.f32 %v1783, %v1857
        %v1890 = vadd.s32 %v1458, %v788
        %v1891 = vlaneseq
        %v1892 = vshrl.u32 %v1891, 7
        %v1893 = vsub.s32 0, %v1892
        %v1894 = vrot.slane %v1890, %v1893
        %vm1895 = vcmp.eq.s32.totalorder %v280, %v1894
        %vm1896 = vcmp.eq.s32.totalorder %v281, %v1894
        %vm1897 = vcmp.eq.s32.totalorder %v282, %v1894
        %vm1898 = vcmp.eq.s32.totalorder %v283, %v1894
        %vm1899 = vcmp.eq.s32.totalorder %v284, %v1894
        %vm1900 = vcmp.eq.s32.totalorder %v285, %v1894
        %vm1901 = vcmp.eq.s32.totalorder %v286, %v1894
        %vm1902 = vcmp.eq.s32.totalorder %v287, %v1894
        %vm1903 = vcmp.eq.s32.totalorder %v288, %v1894
        %vm1904 = vcmp.eq.s32.totalorder %v289, %v1894
        %vm1905 = vcmp.eq.s32.totalorder %v290, %v1894
        %vm1906 = vcmp.eq.s32.totalorder %v291, %v1894
        %vm1907 = vcmp.eq.s32.totalorder %v292, %v1894
        %vm1908 = vcmp.eq.s32.totalorder %v293, %v1894
        %vm1909 = vcmp.eq.s32.totalorder %v294, %v1894
        %vm1910 = vcmp.eq.s32.totalorder %v295, %v1894
        %vm1911 = vcmp.eq.s32.totalorder %v296, %v1894
        %vm1912 = vcmp.eq.s32.totalorder %v297, %v1894
        %vm1913 = vcmp.eq.s32.totalorder %v298, %v1894
        %vm1914 = vcmp.eq.s32.totalorder %v299, %v1894
        %vm1915 = vcmp.eq.s32.totalorder %v300, %v1894
        %vm1916 = vcmp.eq.s32.totalorder %v301, %v1894
        %vm1917 = vcmp.eq.s32.totalorder %v302, %v1894
        %vm1918 = vcmp.eq.s32.totalorder %v303, %v1894
        %vm1919 = vcmp.eq.s32.totalorder %v304, %v1894
        %vm1920 = vcmp.eq.s32.totalorder %v305, %v1894
        %vm1921 = vcmp.eq.s32.totalorder %v306, %v1894
        %vm1922 = vcmp.eq.s32.totalorder %v307, %v1894
        %vm1923 = vcmp.eq.s32.totalorder %v308, %v1894
        %vm1924 = vcmp.eq.s32.totalorder %v309, %v1894
        %vm1925 = vcmp.eq.s32.totalorder %v310, %v1894
        %vm1926 = vcmp.eq.s32.totalorder %v311, %v1894
        %v1927 = vmul.f32 %v1676, %v1673
        %v1928 = vlaneseq
        %v1929 = vshrl.u32 %v1928, 7
        %v1930 = vsub.s32 0, %v1929
        %v1931 = vrot.slane %v1927, %v1930
        %v1932 = vsel %vm1895, %v1931, 0.0
        %v1933 = vsel %vm1896, %v1931, 0.0
        %v1934 = vsel %vm1897, %v1931, 0.0
        %v1935 = vsel %vm1898, %v1931, 0.0
        %v1936 = vsel %vm1899, %v1931, 0.0
        %v1937 = vsel %vm1900, %v1931, 0.0
        %v1938 = vsel %vm1901, %v1931, 0.0
        %v1939 = vsel %vm1902, %v1931, 0.0
        %v1940 = vsel %vm1903, %v1931, 0.0
        %v1941 = vsel %vm1904, %v1931, 0.0
        %v1942 = vsel %vm1905, %v1931, 0.0
        %v1943 = vsel %vm1906, %v1931, 0.0
        %v1944 = vsel %vm1907, %v1931, 0.0
        %v1945 = vsel %vm1908, %v1931, 0.0
        %v1946 = vsel %vm1909, %v1931, 0.0
        %v1947 = vsel %vm1910, %v1931, 0.0
        %v1948 = vsel %vm1911, %v1931, 0.0
        %v1949 = vsel %vm1912, %v1931, 0.0
        %v1950 = vsel %vm1913, %v1931, 0.0
        %v1951 = vsel %vm1914, %v1931, 0.0
        %v1952 = vsel %vm1915, %v1931, 0.0
        %v1953 = vsel %vm1916, %v1931, 0.0
        %v1954 = vsel %vm1917, %v1931, 0.0
        %v1955 = vsel %vm1918, %v1931, 0.0
        %v1956 = vsel %vm1919, %v1931, 0.0
        %v1957 = vsel %vm1920, %v1931, 0.0
        %v1958 = vsel %vm1921, %v1931, 0.0
        %v1959 = vsel %vm1922, %v1931, 0.0
        %v1960 = vsel %vm1923, %v1931, 0.0
        %v1961 = vsel %vm1924, %v1931, 0.0
        %v1962 = vsel %vm1925, %v1931, 0.0
        %v1963 = vsel %vm1926, %v1931, 0.0
        %v1964 = vadd.f32 %v1858, %v1932
        %v1965 = vadd.f32 %v1859, %v1933
        %v1966 = vadd.f32 %v1860, %v1934
        %v1967 = vadd.f32 %v1861, %v1935
        %v1968 = vadd.f32 %v1862, %v1936
        %v1969 = vadd.f32 %v1863, %v1937
        %v1970 = vadd.f32 %v1864, %v1938
        %v1971 = vadd.f32 %v1865, %v1939
        %v1972 = vadd.f32 %v1866, %v1940
        %v1973 = vadd.f32 %v1867, %v1941
        %v1974 = vadd.f32 %v1868, %v1942
        %v1975 = vadd.f32 %v1869, %v1943
        %v1976 = vadd.f32 %v1870, %v1944
        %v1977 = vadd.f32 %v1871, %v1945
        %v1978 = vadd.f32 %v1872, %v1946
        %v1979 = vadd.f32 %v1873, %v1947
        %v1980 = vadd.f32 %v1874, %v1948
        %v1981 = vadd.f32 %v1875, %v1949
        %v1982 = vadd.f32 %v1876, %v1950
        %v1983 = vadd.f32 %v1877, %v1951
        %v1984 = vadd.f32 %v1878, %v1952
        %v1985 = vadd.f32 %v1879, %v1953
        %v1986 = vadd.f32 %v1880, %v1954
        %v1987 = vadd.f32 %v1881, %v1955
        %v1988 = vadd.f32 %v1882, %v1956
        %v1989 = vadd.f32 %v1883, %v1957
        %v1990 = vadd.f32 %v1884, %v1958
        %v1991 = vadd.f32 %v1885, %v1959
        %v1992 = vadd.f32 %v1886, %v1960
        %v1993 = vadd.f32 %v1887, %v1961
        %v1994 = vadd.f32 %v1888, %v1962
        %v1995 = vadd.f32 %v1889, %v1963
        %v1996 = vadd.s32 %v1458, %v787
        %v1997 = vlaneseq
        %v1998 = vshrl.u32 %v1997, 7
        %v1999 = vsub.s32 0, %v1998
        %v2000 = vrot.slane %v1996, %v1999
        %vm2001 = vcmp.eq.s32.totalorder %v280, %v2000
        %vm2002 = vcmp.eq.s32.totalorder %v281, %v2000
        %vm2003 = vcmp.eq.s32.totalorder %v282, %v2000
        %vm2004 = vcmp.eq.s32.totalorder %v283, %v2000
        %vm2005 = vcmp.eq.s32.totalorder %v284, %v2000
        %vm2006 = vcmp.eq.s32.totalorder %v285, %v2000
        %vm2007 = vcmp.eq.s32.totalorder %v286, %v2000
        %vm2008 = vcmp.eq.s32.totalorder %v287, %v2000
        %vm2009 = vcmp.eq.s32.totalorder %v288, %v2000
        %vm2010 = vcmp.eq.s32.totalorder %v289, %v2000
        %vm2011 = vcmp.eq.s32.totalorder %v290, %v2000
        %vm2012 = vcmp.eq.s32.totalorder %v291, %v2000
        %vm2013 = vcmp.eq.s32.totalorder %v292, %v2000
        %vm2014 = vcmp.eq.s32.totalorder %v293, %v2000
        %vm2015 = vcmp.eq.s32.totalorder %v294, %v2000
        %vm2016 = vcmp.eq.s32.totalorder %v295, %v2000
        %vm2017 = vcmp.eq.s32.totalorder %v296, %v2000
        %vm2018 = vcmp.eq.s32.totalorder %v297, %v2000
        %vm2019 = vcmp.eq.s32.totalorder %v298, %v2000
        %vm2020 = vcmp.eq.s32.totalorder %v299, %v2000
        %vm2021 = vcmp.eq.s32.totalorder %v300, %v2000
        %vm2022 = vcmp.eq.s32.totalorder %v301, %v2000
        %vm2023 = vcmp.eq.s32.totalorder %v302, %v2000
        %vm2024 = vcmp.eq.s32.totalorder %v303, %v2000
        %vm2025 = vcmp.eq.s32.totalorder %v304, %v2000
        %vm2026 = vcmp.eq.s32.totalorder %v305, %v2000
        %vm2027 = vcmp.eq.s32.totalorder %v306, %v2000
        %vm2028 = vcmp.eq.s32.totalorder %v307, %v2000
        %vm2029 = vcmp.eq.s32.totalorder %v308, %v2000
        %vm2030 = vcmp.eq.s32.totalorder %v309, %v2000
        %vm2031 = vcmp.eq.s32.totalorder %v310, %v2000
        %vm2032 = vcmp.eq.s32.totalorder %v311, %v2000
        %v2033 = vmul.f32 %v1677, %v1673
        %v2034 = vlaneseq
        %v2035 = vshrl.u32 %v2034, 7
        %v2036 = vsub.s32 0, %v2035
        %v2037 = vrot.slane %v2033, %v2036
        %v2038 = vsel %vm2001, %v2037, 0.0
        %v2039 = vsel %vm2002, %v2037, 0.0
        %v2040 = vsel %vm2003, %v2037, 0.0
        %v2041 = vsel %vm2004, %v2037, 0.0
        %v2042 = vsel %vm2005, %v2037, 0.0
        %v2043 = vsel %vm2006, %v2037, 0.0
        %v2044 = vsel %vm2007, %v2037, 0.0
        %v2045 = vsel %vm2008, %v2037, 0.0
        %v2046 = vsel %vm2009, %v2037, 0.0
        %v2047 = vsel %vm2010, %v2037, 0.0
        %v2048 = vsel %vm2011, %v2037, 0.0
        %v2049 = vsel %vm2012, %v2037, 0.0
        %v2050 = vsel %vm2013, %v2037, 0.0
        %v2051 = vsel %vm2014, %v2037, 0.0
        %v2052 = vsel %vm2015, %v2037, 0.0
        %v2053 = vsel %vm2016, %v2037, 0.0
        %v2054 = vsel %vm2017, %v2037, 0.0
        %v2055 = vsel %vm2018, %v2037, 0.0
        %v2056 = vsel %vm2019, %v2037, 0.0
        %v2057 = vsel %vm2020, %v2037, 0.0
        %v2058 = vsel %vm2021, %v2037, 0.0
        %v2059 = vsel %vm2022, %v2037, 0.0
        %v2060 = vsel %vm2023, %v2037, 0.0
        %v2061 = vsel %vm2024, %v2037, 0.0
        %v2062 = vsel %vm2025, %v2037, 0.0
        %v2063 = vsel %vm2026, %v2037, 0.0
        %v2064 = vsel %vm2027, %v2037, 0.0
        %v2065 = vsel %vm2028, %v2037, 0.0
        %v2066 = vsel %vm2029, %v2037, 0.0
        %v2067 = vsel %vm2030, %v2037, 0.0
        %v2068 = vsel %vm2031, %v2037, 0.0
        %v2069 = vsel %vm2032, %v2037, 0.0
        %v2070 = vadd.f32 %v1964, %v2038
        %v2071 = vadd.f32 %v1965, %v2039
        %v2072 = vadd.f32 %v1966, %v2040
        %v2073 = vadd.f32 %v1967, %v2041
        %v2074 = vadd.f32 %v1968, %v2042
        %v2075 = vadd.f32 %v1969, %v2043
        %v2076 = vadd.f32 %v1970, %v2044
        %v2077 = vadd.f32 %v1971, %v2045
        %v2078 = vadd.f32 %v1972, %v2046
        %v2079 = vadd.f32 %v1973, %v2047
        %v2080 = vadd.f32 %v1974, %v2048
        %v2081 = vadd.f32 %v1975, %v2049
        %v2082 = vadd.f32 %v1976, %v2050
        %v2083 = vadd.f32 %v1977, %v2051
        %v2084 = vadd.f32 %v1978, %v2052
        %v2085 = vadd.f32 %v1979, %v2053
        %v2086 = vadd.f32 %v1980, %v2054
        %v2087 = vadd.f32 %v1981, %v2055
        %v2088 = vadd.f32 %v1982, %v2056
        %v2089 = vadd.f32 %v1983, %v2057
        %v2090 = vadd.f32 %v1984, %v2058
        %v2091 = vadd.f32 %v1985, %v2059
        %v2092 = vadd.f32 %v1986, %v2060
        %v2093 = vadd.f32 %v1987, %v2061
        %v2094 = vadd.f32 %v1988, %v2062
        %v2095 = vadd.f32 %v1989, %v2063
        %v2096 = vadd.f32 %v1990, %v2064
        %v2097 = vadd.f32 %v1991, %v2065
        %v2098 = vadd.f32 %v1992, %v2066
        %v2099 = vadd.f32 %v1993, %v2067
        %v2100 = vadd.f32 %v1994, %v2068
        %v2101 = vadd.f32 %v1995, %v2069
        %v2102 = vld [vmem:[#allocation3] sm:$0xff]
        %v2103 = vld [vmem:[#allocation3 + $0x8] sm:$0xff]
        %v2104 = vpack.c.bf16 %v2102, %v2102
        %v2105 = vpack.c.bf16 %v2103, %v2103
        %v2106 = vpack.c.bf16 %v2071, %v2070
        %v2107 = vpack.c.bf16 %v2073, %v2072
        %v2108 = vpack.c.bf16 %v2075, %v2074
        %v2109 = vpack.c.bf16 %v2077, %v2076
        %v2110 = vpack.c.bf16 %v2079, %v2078
        %v2111 = vpack.c.bf16 %v2081, %v2080
        %v2112 = vpack.c.bf16 %v2083, %v2082
        %v2113 = vpack.c.bf16 %v2085, %v2084
        %v2114 = vpack.c.bf16 %v2087, %v2086
        %v2115 = vpack.c.bf16 %v2089, %v2088
        %v2116 = vpack.c.bf16 %v2091, %v2090
        %v2117 = vpack.c.bf16 %v2093, %v2092
        %v2118 = vpack.c.bf16 %v2095, %v2094
        %v2119 = vpack.c.bf16 %v2097, %v2096
        %v2120 = vpack.c.bf16 %v2099, %v2098
        %v2121 = vpack.c.bf16 %v2101, %v2100
        %2122 = vmatprep.subr.bf16.mxu0 0
        %2123 = vmatpush1.bf16.msra.mxu0 %v2106
        %2124 = vmatprep.subr.bf16.mxu0 0
        %2125 = vmatpush1.bf16.msra.mxu0 %v2107
        %2126 = vmatprep.subr.bf16.mxu0 0
        %2127 = vmatpush1.bf16.msra.mxu0 %v2108
        %2128 = vmatprep.subr.bf16.mxu0 0
        %2129 = vmatpush1.bf16.msra.mxu0 %v2109
        %2130 = vmatprep.subr.bf16.mxu0 0
        %2131 = vmatpush1.bf16.msra.mxu0 %v2110
        %2132 = vmatprep.subr.bf16.mxu0 0
        %2133 = vmatpush1.bf16.msra.mxu0 %v2111
        %2134 = vmatprep.subr.bf16.mxu0 0
        %2135 = vmatpush1.bf16.msra.mxu0 %v2112
        %2136 = vmatprep.subr.bf16.mxu0 0
        %2137 = vmatpush1.bf16.msra.mxu0 %v2113
        %2138 = vmatprep.subr.bf16.mxu0 0
        %2139 = vmatpush1.bf16.msra.mxu0 %v2114
        %2140 = vmatprep.subr.bf16.mxu0 0
        %2141 = vmatpush1.bf16.msra.mxu0 %v2115
        %2142 = vmatprep.subr.bf16.mxu0 0
        %2143 = vmatpush1.bf16.msra.mxu0 %v2116
        %2144 = vmatprep.subr.bf16.mxu0 0
        %2145 = vmatpush1.bf16.msra.mxu0 %v2117
        %2146 = vmatprep.subr.bf16.mxu0 0
        %2147 = vmatpush1.bf16.msra.mxu0 %v2118
        %2148 = vmatprep.subr.bf16.mxu0 0
        %2149 = vmatpush1.bf16.msra.mxu0 %v2119
        %2150 = vmatprep.subr.bf16.mxu0 0
        %2151 = vmatpush1.bf16.msra.mxu0 %v2120
        %2152 = vmatprep.subr.bf16.mxu0 0
        %2153 = vmatpush1.bf16.msra.mxu0 %v2121
        %2154 = vmatprep.mubr.bf16.mxu0 %v2105
        %2155 = vmatmul.mubr.bf16.gmra.mrb[0].mxu0 %v2104
        %v2156 = vpop.f32.mrb[0].mxu0
        %v2157 = vadd.f32 0.0, %v2156
        %v2158 = vpop.f32.mrb[0].mxu0
        %v2159 = vpop.f32.mrb[0].mxu0
        %v2160 = vpop.f32.mrb[0].mxu0
        %2161 = vdwg.mxu0
        %2162 = vst [vmem:[%s237] sm:$0xff] %v2157
        %s2163 = sand.u32 %s125, 1
        %s2164 = scalar_lea.sflag [#allocation5], %s2163
        %s2165 = sand.u32 %s125, 1
        %s2166 = smul.addr %s2165, 8
        %s2167 = scalar_lea.vmem [#allocation8], %s2166
        // Predicated region
        $region45: #{tpu_custom_call.1} parent=35 // pred_check
          %p2168 = pneg %p135
        $region46: #{tpu_custom_call.1} parent=35 // pred_check_branch
          %2170 = sbr.rel (%p2168) target = $region48
        $region47: #{tpu_custom_call.1} parent=35 // pred_region
          %s2172 = ssub.s32 128, 128
          %2173 = vsyncadd %s2164, %s2172
          %s2174 = smul.addr %s23, 128
          %s2175 = scalar_lea.hbm %s4, %s2174
          %s2177 = sshll.u32 %s2167, 4
          %s2178 = int_to_ptr.vmem [resolvable:$true] %s2177
          %2180 = dma.vmem_to_hbm [thread:$0]  %s2178, 128, %s2175, %s2164
        $region48: #{tpu_custom_call.1} parent=35 // pred_fallthru
          _
      $region36: #{tpu_custom_call.1} parent=5 // pred_fallthru
        _
      %p2181 = scmp.le.s32.totalorder 2, %s18
      // Predicated region
      $region49: #{tpu_custom_call.1} parent=5 // pred_check
        %p2182 = pneg %p2181
      $region50: #{tpu_custom_call.1} parent=5 // pred_check_branch
        %2184 = sbr.rel (%p2182) target = $region52
      $region51: #{tpu_custom_call.1} parent=5 // pred_region
        %s2185 = ssub.s32 %s18, 2
        // Predicated region
        $region53: #{tpu_custom_call.1} parent=51 // pred_check
          %p2186 = pneg %p141
        $region54: #{tpu_custom_call.1} parent=51 // pred_check_branch
          %2188 = sbr.rel (%p2186) target = $region56
        $region55: #{tpu_custom_call.1} parent=51 // pred_region
          %s2189 = sand.u32 %s126, 1
          %s2190 = scalar_lea.sflag [#allocation5], %s2189
          %s2191 = sand.u32 %s126, 1
          %s2192 = smul.addr %s2191, 8
          %s2193 = scalar_lea.vmem [#allocation8], %s2192
          %2194 = dma.done %s2190, 128
        $region56: #{tpu_custom_call.1} parent=51 // pred_fallthru
          _
      $region52: #{tpu_custom_call.1} parent=5 // pred_fallthru
        _
    $region6: #{tpu_custom_call.1} parent=1 // loop_footer
      %s22 = sadd.s32 1, %s18
    $region7: #{tpu_custom_call.1} parent=1 // loop_footer_branch
      %17 = sbr.rel target = $region3
    $region8: #{tpu_custom_call.1} parent=1 // loop_exit
      _
    %2195 = vsyncpa [#allocation4], 1
    %s2196 = scalar_lea.sflag [#allocation4], 1
    %2197 = vsyncpa %s2196, 1
    %2198 = vsyncpa [#allocation7], 1
    %s2199 = scalar_lea.sflag [#allocation7], 1
    %2200 = vsyncpa %s2199, 1
    %2201 = vsyncpa [#allocation5], 1
    %s2202 = scalar_lea.sflag [#allocation5], 1
    %2203 = vsyncpa %s2202, 1

</llo_original>
